<compile_context>
chip_gen: v6e
topology: v6e:2x2x1
jax: 0.10.0
libtpu: 0.0.40
codegen_flags: <defaults>
</compile_context>

<pallas_src>
from functools import partial

import jax
import jax.numpy as jnp
from jax.experimental import pallas as pl
from jax.experimental.pallas import tpu as pltpu


# --------------------------------------------------------------------------
# Scatter: per grid step, one (t, row) HBM->VMEM staging DMA + t VMEM->HBM
# row writes; waits for step i's writes are deferred to step i+1.
# --------------------------------------------------------------------------
def _kv_insert_kernel(slots_ref, in_hbm, cache_in_hbm, cache_hbm,
                      stage, in_sems, out_sems, *, t, nsteps):
    del cache_in_hbm  # same HBM buffer as cache_hbm via input_output_aliases
    i = pl.program_id(0)
    base = pl.multiple_of(i * t, t)
    bank = i & 1
    other = 1 - bank

    # 1) All SMEM slot reads for this chunk happen before any .wait().
    slots = [slots_ref[base + l] for l in range(t)]

    # 2) Deferred drain: wait for chunk i-1's scatter writes (frees stage bank
    #    `other` for the chunk-(i+1) staging load below).
    @pl.when(i > 0)
    def _drain_prev():
        for l in range(t):
            pltpu.make_async_copy(
                stage.at[pl.ds(0, 1)], cache_hbm.at[pl.ds(0, 1)],
                out_sems.at[other, l]).wait()

    # 3) Prime: stage chunk 0 on the first step.
    @pl.when(i == 0)
    def _prime():
        pltpu.make_async_copy(
            in_hbm.at[pl.ds(0, t)], stage.at[pl.ds(0, t)],
            in_sems.at[0]).start()

    # 4) Prefetch: stage chunk i+1 into the other bank (overlaps with issuing
    #    this chunk's writes).
    @pl.when(i + 1 < nsteps)
    def _prefetch_next():
        nxt = pl.multiple_of((i + 1) * t, t)
        dst = pl.multiple_of(other * t, t)
        pltpu.make_async_copy(
            in_hbm.at[pl.ds(nxt, t)], stage.at[pl.ds(dst, t)],
            in_sems.at[other]).start()

    # 5) Wait for this chunk's staged input rows.
    pltpu.make_async_copy(
        in_hbm.at[pl.ds(0, t)], stage.at[pl.ds(0, t)],
        in_sems.at[bank]).wait()

    # 6) Issue this chunk's per-token VMEM->HBM scatter writes (unguarded:
    #    slot table / input rows are edge-padded to a full chunk).
    for l in range(t):
        pltpu.make_async_copy(
            stage.at[pl.ds(bank * t + l, 1)],
            cache_hbm.at[pl.ds(slots[l], 1)],
            out_sems.at[bank, l]).start()

    # 7) Final drain on the last step (previous bank already drained in 2).
    @pl.when(i == nsteps - 1)
    def _drain_last():
        for l in range(t):
            pltpu.make_async_copy(
                stage.at[pl.ds(0, 1)], cache_hbm.at[pl.ds(0, 1)],
                out_sems.at[bank, l]).wait()


def vllm_kv_cache_forward(inp, cache, num_kv_cache_passes, num_slots_available,
                          block_indices, block_offset, tokens_per_step=16):
    """Scatter `inp` rows into `cache` at (block_indices, block_offset).

    NOTE: num_kv_cache_passes / num_slots_available must be static Python ints
    (they are a graph-splitting workaround on HPU). For true in-place update,
    jit callers should donate the cache buffer (donate_argnums); otherwise XLA
    inserts a full-cache copy before the kernel (results stay correct).
    Destination slots are assumed unique within a call (vLLM contract).
    """
    num_tokens = inp.shape[0]
    n_write = min(num_tokens, int(num_kv_cache_passes) * int(num_slots_available))
    if n_write <= 0:
        return cache

    num_blocks, block_size, num_heads, head_size = cache.shape
    row = num_heads * head_size
    t = max(1, min(tokens_per_step, n_write))
    nsteps = pl.cdiv(n_write, t)
    n_pad = nsteps * t

    # Flat slot table (SMEM scalar-prefetch) and lane-dense flat views.
    flat_slots = (block_indices[:n_write].astype(jnp.int32) * block_size
                  + block_offset[:n_write].astype(jnp.int32))
    inp_flat = inp.astype(cache.dtype).reshape(num_tokens, row)[:n_write]
    if n_pad > n_write:
        pad = n_pad - n_write
        # Edge padding: padded tokens rewrite the last real slot with the last
        # real row -> idempotent, lets the kernel issue full unguarded chunks.
        flat_slots = jnp.pad(flat_slots, (0, pad), mode="edge")
        inp_flat = jnp.pad(inp_flat, ((0, pad), (0, 0)), mode="edge")
    cache_flat = cache.reshape(num_blocks * block_size, row)

    out = pl.pallas_call(
        partial(_kv_insert_kernel, t=t, nsteps=nsteps),
        out_shape=jax.ShapeDtypeStruct(cache_flat.shape, cache.dtype),
        grid_spec=pltpu.PrefetchScalarGridSpec(
            num_scalar_prefetch=1,                     # flat_slots -> SMEM
            grid=(nsteps,),
            in_specs=[
                pl.BlockSpec(memory_space=pl.ANY),     # padded input rows (HBM)
                pl.BlockSpec(memory_space=pl.ANY),     # cache (HBM)
            ],
            out_specs=pl.BlockSpec(memory_space=pl.ANY),
            scratch_shapes=[
                pltpu.VMEM((2 * t, row), cache.dtype),   # double-banked stage
                pltpu.SemaphoreType.DMA((2,)),           # staging loads
                pltpu.SemaphoreType.DMA((2, t)),         # per-token writes
            ]),
        # operands: (flat_slots, inp_flat, cache_flat) -> cache is operand 2
        # (index counts scalar-prefetch operands, as in megablox gmm).
        input_output_aliases={2: 0},
        # "arbitrary": deferred waits require sequential steps on one core.
        compiler_params=pltpu.CompilerParams(dimension_semantics=("arbitrary",)),
        cost_estimate=pl.CostEstimate(
            flops=0, transcendentals=0,
            bytes_accessed=2 * n_write * row * cache.dtype.itemsize),
    )(flat_slots, inp_flat, cache_flat)

    return out.reshape(num_blocks, block_size, num_heads, head_size)


# --------------------------------------------------------------------------
# Gather (fetch_from_cache): direct HBM->HBM block copies, g in flight per
# step, waits deferred by one grid step (double-banked semaphores).
# --------------------------------------------------------------------------
def _kv_fetch_kernel(blocks_ref, cache_hbm, out_hbm, sems, *, g, n, nsteps):
    i = pl.program_id(0)
    base = pl.multiple_of(i * g, g)
    bank = i & 1
    other = 1 - bank

    # Deferred drain of chunk i-1 (always a full chunk).
    @pl.when(i > 0)
    def _drain_prev():
        for l in range(g):
            pltpu.make_async_copy(
                cache_hbm.at[pl.ds(0, 1)], out_hbm.at[pl.ds(0, 1)],
                sems.at[other, l]).wait()

    full = base + g <= n

    # Hot path: full chunk, no per-item guards.
    @pl.when(full)
    def _issue_full():
        for l in range(g):
            blk = blocks_ref[base + l]
            pltpu.make_async_copy(
                cache_hbm.at[pl.ds(blk, 1)], out_hbm.at[pl.ds(base + l, 1)],
                sems.at[bank, l]).start()

    # Ragged tail (only ever the last step).
    @pl.when(jnp.logical_not(full))
    def _issue_tail():
        for l in range(g):
            @pl.when(base + l < n)
            def _start(l=l):
                blk = blocks_ref[base + l]
                pltpu.make_async_copy(
                    cache_hbm.at[pl.ds(blk, 1)], out_hbm.at[pl.ds(base + l, 1)],
                    sems.at[bank, l]).start()

    # Final drain: wait exactly the copies issued this step.
    @pl.when(i == nsteps - 1)
    def _drain_last():
        for l in range(g):
            @pl.when(base + l < n)
            def _wait(l=l):
                pltpu.make_async_copy(
                    cache_hbm.at[pl.ds(0, 1)], out_hbm.at[pl.ds(0, 1)],
                    sems.at[bank, l]).wait()


def vllm_kv_cache_fetch(cache, blocks, blocks_per_step=16):
    num_blocks, block_size, num_heads, head_size = cache.shape
    row = block_size * num_heads * head_size
    n = int(blocks.shape[0])
    if n == 0:
        return jnp.zeros((0, block_size, num_heads, head_size), cache.dtype)
    g = max(1, min(blocks_per_step, n))
    nsteps = pl.cdiv(n, g)

    cache_flat = cache.reshape(num_blocks, row)

    out = pl.pallas_call(
        partial(_kv_fetch_kernel, g=g, n=n, nsteps=nsteps),
        out_shape=jax.ShapeDtypeStruct((n, row), cache.dtype),
        grid_spec=pltpu.PrefetchScalarGridSpec(
            num_scalar_prefetch=1,                     # blocks -> SMEM
            grid=(nsteps,),
            in_specs=[pl.BlockSpec(memory_space=pl.ANY)],
            out_specs=pl.BlockSpec(memory_space=pl.ANY),
            scratch_shapes=[pltpu.SemaphoreType.DMA((2, g))]),
        compiler_params=pltpu.CompilerParams(dimension_semantics=("arbitrary",)),
        cost_estimate=pl.CostEstimate(
            flops=0, transcendentals=0,
            bytes_accessed=2 * n * row * cache.dtype.itemsize),
    )(blocks.astype(jnp.int32), cache_flat)

    return out.reshape(n, block_size, num_heads, head_size)


class VLLMKVCache:
    """JAX/Pallas port of vllm.hpu.utils.VLLMKVCache (no parameters)."""

    def forward(self, inp, cache, num_kv_cache_passes, num_slots_available,
                block_indices, block_offset):
        return vllm_kv_cache_forward(inp, cache, num_kv_cache_passes,
                                     num_slots_available, block_indices,
                                     block_offset)

    def fetch_from_cache(self, cache, blocks):
        return vllm_kv_cache_fetch(cache, blocks)


if __name__ == "__main__":
    key = jax.random.PRNGKey(0)
    k_in, k_cache, k_slots = jax.random.split(key, 3)

    # Small, module-consistent shapes (H*D = 128 -> lane-dense rows).
    num_blocks, block_size, num_heads, head_size = 8, 4, 4, 32
    num_tokens = 24                       # 2 grid steps at t=16 (tests deferred waits)
    num_kv_cache_passes, num_slots_available = 3, 8   # 3 * 8 == num_tokens

    inp = jax.random.normal(k_in, (num_tokens, num_heads, head_size),
                            dtype=jnp.float32)
    cache = jax.random.normal(
        k_cache, (num_blocks, block_size, num_heads, head_size),
        dtype=jnp.float32)

    # Distinct destination slots (torch index_put_ with duplicates is undefined).
    flat_slots = jax.random.permutation(k_slots,
                                        num_blocks * block_size)[:num_tokens]
    block_indices = (flat_slots // block_size).astype(jnp.int32)
    block_offset = (flat_slots % block_size).astype(jnp.int32)

    # Reference computed (and materialized) BEFORE the buffer-aliased kernel.
    ref_cache = jax.block_until_ready(
        cache.at[block_indices, block_offset].set(inp))

    module = VLLMKVCache()

    # --- forward (scatter into cache) ---
    new_cache = jax.block_until_ready(
        module.forward(inp, cache, num_kv_cache_passes, num_slots_available,
                       block_indices, block_offset))
    assert new_cache.shape == cache.shape
    assert jnp.allclose(new_cache, ref_cache), "scatter mismatch"

    # --- fetch_from_cache (gather) ---
    blocks = jnp.array([3, 0, 5, 3, 6], dtype=jnp.int32)
    # Small chunk to exercise multi-step grid + ragged tail + deferred waits.
    fetched = jax.block_until_ready(
        vllm_kv_cache_fetch(new_cache, blocks, blocks_per_step=2))
    assert fetched.shape == (5, block_size, num_heads, head_size)
    assert jnp.allclose(fetched, ref_cache[blocks]), "gather mismatch"

    # Default-chunk path through the class API.
    fetched2 = jax.block_until_ready(module.fetch_from_cache(new_cache, blocks))
    assert jnp.allclose(fetched2, ref_cache[blocks]), "gather mismatch (default)"

    print("KERNEL_OK")
</pallas_src>

<mosaic_0001>
module attributes {stable_mosaic.version = 11 : i64} {
  func.func @_kv_insert_kernel(%arg0: i32, %arg1: memref<32xi32, #tpu.memory_space<smem>>, %arg2: memref<32x128xf32, #tpu.memory_space<any>>, %arg3: memref<32x128xf32, #tpu.memory_space<any>>, %arg4: memref<32x128xf32, #tpu.memory_space<any>>, %arg5: memref<32x128xf32, #tpu.memory_space<vmem>>, %arg6: memref<2x!tpu.dma_semaphore, #tpu.memory_space<semaphore_mem>>, %arg7: memref<2x16x!tpu.dma_semaphore, #tpu.memory_space<semaphore_mem>>) attributes {dimension_semantics = [#tpu.dimension_semantics<arbitrary>], iteration_bounds = array<i64: 2>, scalar_prefetch = 1 : i64, scratch_operands = 3 : i64, tpu.core_type = #tpu.core_type<tc>, window_params = [{}, {}, {}]} {
    %c16_i32 = arith.constant 16 : i32
    %0 = arith.muli %arg0, %c16_i32 : i32
    %1 = tpu.assume_multiple %0, 16 : i32
    %c1_i32 = arith.constant 1 : i32
    %2 = arith.andi %arg0, %c1_i32 : i32
    %c1_i32_0 = arith.constant 1 : i32
    %3 = arith.subi %c1_i32_0, %2 : i32
    %c0_i32 = arith.constant 0 : i32
    %4 = arith.addi %1, %c0_i32 : i32
    %5 = arith.index_cast %4 : i32 to index
    %6 = memref.load %arg1[%5] : memref<32xi32, #tpu.memory_space<smem>>
    %c1_i32_1 = arith.constant 1 : i32
    %7 = arith.addi %1, %c1_i32_1 : i32
    %8 = arith.index_cast %7 : i32 to index
    %9 = memref.load %arg1[%8] : memref<32xi32, #tpu.memory_space<smem>>
    %c2_i32 = arith.constant 2 : i32
    %10 = arith.addi %1, %c2_i32 : i32
    %11 = arith.index_cast %10 : i32 to index
    %12 = memref.load %arg1[%11] : memref<32xi32, #tpu.memory_space<smem>>
    %c3_i32 = arith.constant 3 : i32
    %13 = arith.addi %1, %c3_i32 : i32
    %14 = arith.index_cast %13 : i32 to index
    %15 = memref.load %arg1[%14] : memref<32xi32, #tpu.memory_space<smem>>
    %c4_i32 = arith.constant 4 : i32
    %16 = arith.addi %1, %c4_i32 : i32
    %17 = arith.index_cast %16 : i32 to index
    %18 = memref.load %arg1[%17] : memref<32xi32, #tpu.memory_space<smem>>
    %c5_i32 = arith.constant 5 : i32
    %19 = arith.addi %1, %c5_i32 : i32
    %20 = arith.index_cast %19 : i32 to index
    %21 = memref.load %arg1[%20] : memref<32xi32, #tpu.memory_space<smem>>
    %c6_i32 = arith.constant 6 : i32
    %22 = arith.addi %1, %c6_i32 : i32
    %23 = arith.index_cast %22 : i32 to index
    %24 = memref.load %arg1[%23] : memref<32xi32, #tpu.memory_space<smem>>
    %c7_i32 = arith.constant 7 : i32
    %25 = arith.addi %1, %c7_i32 : i32
    %26 = arith.index_cast %25 : i32 to index
    %27 = memref.load %arg1[%26] : memref<32xi32, #tpu.memory_space<smem>>
    %c8_i32 = arith.constant 8 : i32
    %28 = arith.addi %1, %c8_i32 : i32
    %29 = arith.index_cast %28 : i32 to index
    %30 = memref.load %arg1[%29] : memref<32xi32, #tpu.memory_space<smem>>
    %c9_i32 = arith.constant 9 : i32
    %31 = arith.addi %1, %c9_i32 : i32
    %32 = arith.index_cast %31 : i32 to index
    %33 = memref.load %arg1[%32] : memref<32xi32, #tpu.memory_space<smem>>
    %c10_i32 = arith.constant 10 : i32
    %34 = arith.addi %1, %c10_i32 : i32
    %35 = arith.index_cast %34 : i32 to index
    %36 = memref.load %arg1[%35] : memref<32xi32, #tpu.memory_space<smem>>
    %c11_i32 = arith.constant 11 : i32
    %37 = arith.addi %1, %c11_i32 : i32
    %38 = arith.index_cast %37 : i32 to index
    %39 = memref.load %arg1[%38] : memref<32xi32, #tpu.memory_space<smem>>
    %c12_i32 = arith.constant 12 : i32
    %40 = arith.addi %1, %c12_i32 : i32
    %41 = arith.index_cast %40 : i32 to index
    %42 = memref.load %arg1[%41] : memref<32xi32, #tpu.memory_space<smem>>
    %c13_i32 = arith.constant 13 : i32
    %43 = arith.addi %1, %c13_i32 : i32
    %44 = arith.index_cast %43 : i32 to index
    %45 = memref.load %arg1[%44] : memref<32xi32, #tpu.memory_space<smem>>
    %c14_i32 = arith.constant 14 : i32
    %46 = arith.addi %1, %c14_i32 : i32
    %47 = arith.index_cast %46 : i32 to index
    %48 = memref.load %arg1[%47] : memref<32xi32, #tpu.memory_space<smem>>
    %c15_i32 = arith.constant 15 : i32
    %49 = arith.addi %1, %c15_i32 : i32
    %50 = arith.index_cast %49 : i32 to index
    %51 = memref.load %arg1[%50] : memref<32xi32, #tpu.memory_space<smem>>
    %c0_i32_2 = arith.constant 0 : i32
    %52 = arith.cmpi sgt, %arg0, %c0_i32_2 : i32
    %53 = arith.extui %52 : i1 to i32
    %c0_i32_3 = arith.constant 0 : i32
    %54 = arith.cmpi ne, %53, %c0_i32_3 : i32
    scf.if %54 {
      %c0_i32_95 = arith.constant 0 : i32
      %c0_i32_96 = arith.constant 0 : i32
      %c0_i32_97 = arith.constant 0 : i32
      %165 = tpu.memref_slice %arg5[%c0_i32_96, %c0_i32_97] : memref<32x128xf32, #tpu.memory_space<vmem>> -> memref<1x128xf32, #tpu.memory_space<vmem>>
      %c0_i32_98 = arith.constant 0 : i32
      %c0_i32_99 = arith.constant 0 : i32
      %166 = tpu.memref_slice %arg4[%c0_i32_98, %c0_i32_99] : memref<32x128xf32, #tpu.memory_space<any>> -> memref<1x128xf32, #tpu.memory_space<any>>
      %167 = tpu.memref_slice %arg7[%3, %c0_i32_95] : memref<2x16x!tpu.dma_semaphore, #tpu.memory_space<semaphore_mem>> -> memref<1x1x!tpu.dma_semaphore, #tpu.memory_space<semaphore_mem>>
      %168 = tpu.memref_squeeze %167 : memref<1x1x!tpu.dma_semaphore, #tpu.memory_space<semaphore_mem>> -> memref<!tpu.dma_semaphore, #tpu.memory_space<semaphore_mem>>
      tpu.wait_dma2 semaphore(%168 : memref<!tpu.dma_semaphore, #tpu.memory_space<semaphore_mem>>) src(%165 : memref<1x128xf32, #tpu.memory_space<vmem>>) dst(%166 : memref<1x128xf32, #tpu.memory_space<any>>)
      %c1_i32_100 = arith.constant 1 : i32
      %c0_i32_101 = arith.constant 0 : i32
      %c0_i32_102 = arith.constant 0 : i32
      %169 = tpu.memref_slice %arg5[%c0_i32_101, %c0_i32_102] : memref<32x128xf32, #tpu.memory_space<vmem>> -> memref<1x128xf32, #tpu.memory_space<vmem>>
      %c0_i32_103 = arith.constant 0 : i32
      %c0_i32_104 = arith.constant 0 : i32
      %170 = tpu.memref_slice %arg4[%c0_i32_103, %c0_i32_104] : memref<32x128xf32, #tpu.memory_space<any>> -> memref<1x128xf32, #tpu.memory_space<any>>
      %171 = tpu.memref_slice %arg7[%3, %c1_i32_100] : memref<2x16x!tpu.dma_semaphore, #tpu.memory_space<semaphore_mem>> -> memref<1x1x!tpu.dma_semaphore, #tpu.memory_space<semaphore_mem>>
      %172 = tpu.memref_squeeze %171 : memref<1x1x!tpu.dma_semaphore, #tpu.memory_space<semaphore_mem>> -> memref<!tpu.dma_semaphore, #tpu.memory_space<semaphore_mem>>
      tpu.wait_dma2 semaphore(%172 : memref<!tpu.dma_semaphore, #tpu.memory_space<semaphore_mem>>) src(%169 : memref<1x128xf32, #tpu.memory_space<vmem>>) dst(%170 : memref<1x128xf32, #tpu.memory_space<any>>)
      %c2_i32_105 = arith.constant 2 : i32
      %c0_i32_106 = arith.constant 0 : i32
      %c0_i32_107 = arith.constant 0 : i32
      %173 = tpu.memref_slice %arg5[%c0_i32_106, %c0_i32_107] : memref<32x128xf32, #tpu.memory_space<vmem>> -> memref<1x128xf32, #tpu.memory_space<vmem>>
      %c0_i32_108 = arith.constant 0 : i32
      %c0_i32_109 = arith.constant 0 : i32
      %174 = tpu.memref_slice %arg4[%c0_i32_108, %c0_i32_109] : memref<32x128xf32, #tpu.memory_space<any>> -> memref<1x128xf32, #tpu.memory_space<any>>
      %175 = tpu.memref_slice %arg7[%3, %c2_i32_105] : memref<2x16x!tpu.dma_semaphore, #tpu.memory_space<semaphore_mem>> -> memref<1x1x!tpu.dma_semaphore, #tpu.memory_space<semaphore_mem>>
      %176 = tpu.memref_squeeze %175 : memref<1x1x!tpu.dma_semaphore, #tpu.memory_space<semaphore_mem>> -> memref<!tpu.dma_semaphore, #tpu.memory_space<semaphore_mem>>
      tpu.wait_dma2 semaphore(%176 : memref<!tpu.dma_semaphore, #tpu.memory_space<semaphore_mem>>) src(%173 : memref<1x128xf32, #tpu.memory_space<vmem>>) dst(%174 : memref<1x128xf32, #tpu.memory_space<any>>)
      %c3_i32_110 = arith.constant 3 : i32
      %c0_i32_111 = arith.constant 0 : i32
      %c0_i32_112 = arith.constant 0 : i32
      %177 = tpu.memref_slice %arg5[%c0_i32_111, %c0_i32_112] : memref<32x128xf32, #tpu.memory_space<vmem>> -> memref<1x128xf32, #tpu.memory_space<vmem>>
      %c0_i32_113 = arith.constant 0 : i32
      %c0_i32_114 = arith.constant 0 : i32
      %178 = tpu.memref_slice %arg4[%c0_i32_113, %c0_i32_114] : memref<32x128xf32, #tpu.memory_space<any>> -> memref<1x128xf32, #tpu.memory_space<any>>
      %179 = tpu.memref_slice %arg7[%3, %c3_i32_110] : memref<2x16x!tpu.dma_semaphore, #tpu.memory_space<semaphore_mem>> -> memref<1x1x!tpu.dma_semaphore, #tpu.memory_space<semaphore_mem>>
      %180 = tpu.memref_squeeze %179 : memref<1x1x!tpu.dma_semaphore, #tpu.memory_space<semaphore_mem>> -> memref<!tpu.dma_semaphore, #tpu.memory_space<semaphore_mem>>
      tpu.wait_dma2 semaphore(%180 : memref<!tpu.dma_semaphore, #tpu.memory_space<semaphore_mem>>) src(%177 : memref<1x128xf32, #tpu.memory_space<vmem>>) dst(%178 : memref<1x128xf32, #tpu.memory_space<any>>)
      %c4_i32_115 = arith.constant 4 : i32
      %c0_i32_116 = arith.constant 0 : i32
      %c0_i32_117 = arith.constant 0 : i32
      %181 = tpu.memref_slice %arg5[%c0_i32_116, %c0_i32_117] : memref<32x128xf32, #tpu.memory_space<vmem>> -> memref<1x128xf32, #tpu.memory_space<vmem>>
      %c0_i32_118 = arith.constant 0 : i32
      %c0_i32_119 = arith.constant 0 : i32
      %182 = tpu.memref_slice %arg4[%c0_i32_118, %c0_i32_119] : memref<32x128xf32, #tpu.memory_space<any>> -> memref<1x128xf32, #tpu.memory_space<any>>
      %183 = tpu.memref_slice %arg7[%3, %c4_i32_115] : memref<2x16x!tpu.dma_semaphore, #tpu.memory_space<semaphore_mem>> -> memref<1x1x!tpu.dma_semaphore, #tpu.memory_space<semaphore_mem>>
      %184 = tpu.memref_squeeze %183 : memref<1x1x!tpu.dma_semaphore, #tpu.memory_space<semaphore_mem>> -> memref<!tpu.dma_semaphore, #tpu.memory_space<semaphore_mem>>
      tpu.wait_dma2 semaphore(%184 : memref<!tpu.dma_semaphore, #tpu.memory_space<semaphore_mem>>) src(%181 : memref<1x128xf32, #tpu.memory_space<vmem>>) dst(%182 : memref<1x128xf32, #tpu.memory_space<any>>)
      %c5_i32_120 = arith.constant 5 : i32
      %c0_i32_121 = arith.constant 0 : i32
      %c0_i32_122 = arith.constant 0 : i32
      %185 = tpu.memref_slice %arg5[%c0_i32_121, %c0_i32_122] : memref<32x128xf32, #tpu.memory_space<vmem>> -> memref<1x128xf32, #tpu.memory_space<vmem>>
      %c0_i32_123 = arith.constant 0 : i32
      %c0_i32_124 = arith.constant 0 : i32
      %186 = tpu.memref_slice %arg4[%c0_i32_123, %c0_i32_124] : memref<32x128xf32, #tpu.memory_space<any>> -> memref<1x128xf32, #tpu.memory_space<any>>
      %187 = tpu.memref_slice %arg7[%3, %c5_i32_120] : memref<2x16x!tpu.dma_semaphore, #tpu.memory_space<semaphore_mem>> -> memref<1x1x!tpu.dma_semaphore, #tpu.memory_space<semaphore_mem>>
      %188 = tpu.memref_squeeze %187 : memref<1x1x!tpu.dma_semaphore, #tpu.memory_space<semaphore_mem>> -> memref<!tpu.dma_semaphore, #tpu.memory_space<semaphore_mem>>
      tpu.wait_dma2 semaphore(%188 : memref<!tpu.dma_semaphore, #tpu.memory_space<semaphore_mem>>) src(%185 : memref<1x128xf32, #tpu.memory_space<vmem>>) dst(%186 : memref<1x128xf32, #tpu.memory_space<any>>)
      %c6_i32_125 = arith.constant 6 : i32
      %c0_i32_126 = arith.constant 0 : i32
      %c0_i32_127 = arith.constant 0 : i32
      %189 = tpu.memref_slice %arg5[%c0_i32_126, %c0_i32_127] : memref<32x128xf32, #tpu.memory_space<vmem>> -> memref<1x128xf32, #tpu.memory_space<vmem>>
      %c0_i32_128 = arith.constant 0 : i32
      %c0_i32_129 = arith.constant 0 : i32
      %190 = tpu.memref_slice %arg4[%c0_i32_128, %c0_i32_129] : memref<32x128xf32, #tpu.memory_space<any>> -> memref<1x128xf32, #tpu.memory_space<any>>
      %191 = tpu.memref_slice %arg7[%3, %c6_i32_125] : memref<2x16x!tpu.dma_semaphore, #tpu.memory_space<semaphore_mem>> -> memref<1x1x!tpu.dma_semaphore, #tpu.memory_space<semaphore_mem>>
      %192 = tpu.memref_squeeze %191 : memref<1x1x!tpu.dma_semaphore, #tpu.memory_space<semaphore_mem>> -> memref<!tpu.dma_semaphore, #tpu.memory_space<semaphore_mem>>
      tpu.wait_dma2 semaphore(%192 : memref<!tpu.dma_semaphore, #tpu.memory_space<semaphore_mem>>) src(%189 : memref<1x128xf32, #tpu.memory_space<vmem>>) dst(%190 : memref<1x128xf32, #tpu.memory_space<any>>)
      %c7_i32_130 = arith.constant 7 : i32
      %c0_i32_131 = arith.constant 0 : i32
      %c0_i32_132 = arith.constant 0 : i32
      %193 = tpu.memref_slice %arg5[%c0_i32_131, %c0_i32_132] : memref<32x128xf32, #tpu.memory_space<vmem>> -> memref<1x128xf32, #tpu.memory_space<vmem>>
      %c0_i32_133 = arith.constant 0 : i32
      %c0_i32_134 = arith.constant 0 : i32
      %194 = tpu.memref_slice %arg4[%c0_i32_133, %c0_i32_134] : memref<32x128xf32, #tpu.memory_space<any>> -> memref<1x128xf32, #tpu.memory_space<any>>
      %195 = tpu.memref_slice %arg7[%3, %c7_i32_130] : memref<2x16x!tpu.dma_semaphore, #tpu.memory_space<semaphore_mem>> -> memref<1x1x!tpu.dma_semaphore, #tpu.memory_space<semaphore_mem>>
      %196 = tpu.memref_squeeze %195 : memref<1x1x!tpu.dma_semaphore, #tpu.memory_space<semaphore_mem>> -> memref<!tpu.dma_semaphore, #tpu.memory_space<semaphore_mem>>
      tpu.wait_dma2 semaphore(%196 : memref<!tpu.dma_semaphore, #tpu.memory_space<semaphore_mem>>) src(%193 : memref<1x128xf32, #tpu.memory_space<vmem>>) dst(%194 : memref<1x128xf32, #tpu.memory_space<any>>)
      %c8_i32_135 = arith.constant 8 : i32
      %c0_i32_136 = arith.constant 0 : i32
      %c0_i32_137 = arith.constant 0 : i32
      %197 = tpu.memref_slice %arg5[%c0_i32_136, %c0_i32_137] : memref<32x128xf32, #tpu.memory_space<vmem>> -> memref<1x128xf32, #tpu.memory_space<vmem>>
      %c0_i32_138 = arith.constant 0 : i32
      %c0_i32_139 = arith.constant 0 : i32
      %198 = tpu.memref_slice %arg4[%c0_i32_138, %c0_i32_139] : memref<32x128xf32, #tpu.memory_space<any>> -> memref<1x128xf32, #tpu.memory_space<any>>
      %199 = tpu.memref_slice %arg7[%3, %c8_i32_135] : memref<2x16x!tpu.dma_semaphore, #tpu.memory_space<semaphore_mem>> -> memref<1x1x!tpu.dma_semaphore, #tpu.memory_space<semaphore_mem>>
      %200 = tpu.memref_squeeze %199 : memref<1x1x!tpu.dma_semaphore, #tpu.memory_space<semaphore_mem>> -> memref<!tpu.dma_semaphore, #tpu.memory_space<semaphore_mem>>
      tpu.wait_dma2 semaphore(%200 : memref<!tpu.dma_semaphore, #tpu.memory_space<semaphore_mem>>) src(%197 : memref<1x128xf32, #tpu.memory_space<vmem>>) dst(%198 : memref<1x128xf32, #tpu.memory_space<any>>)
      %c9_i32_140 = arith.constant 9 : i32
      %c0_i32_141 = arith.constant 0 : i32
      %c0_i32_142 = arith.constant 0 : i32
      %201 = tpu.memref_slice %arg5[%c0_i32_141, %c0_i32_142] : memref<32x128xf32, #tpu.memory_space<vmem>> -> memref<1x128xf32, #tpu.memory_space<vmem>>
      %c0_i32_143 = arith.constant 0 : i32
      %c0_i32_144 = arith.constant 0 : i32
      %202 = tpu.memref_slice %arg4[%c0_i32_143, %c0_i32_144] : memref<32x128xf32, #tpu.memory_space<any>> -> memref<1x128xf32, #tpu.memory_space<any>>
      %203 = tpu.memref_slice %arg7[%3, %c9_i32_140] : memref<2x16x!tpu.dma_semaphore, #tpu.memory_space<semaphore_mem>> -> memref<1x1x!tpu.dma_semaphore, #tpu.memory_space<semaphore_mem>>
      %204 = tpu.memref_squeeze %203 : memref<1x1x!tpu.dma_semaphore, #tpu.memory_space<semaphore_mem>> -> memref<!tpu.dma_semaphore, #tpu.memory_space<semaphore_mem>>
      tpu.wait_dma2 semaphore(%204 : memref<!tpu.dma_semaphore, #tpu.memory_space<semaphore_mem>>) src(%201 : memref<1x128xf32, #tpu.memory_space<vmem>>) dst(%202 : memref<1x128xf32, #tpu.memory_space<any>>)
      %c10_i32_145 = arith.constant 10 : i32
      %c0_i32_146 = arith.constant 0 : i32
      %c0_i32_147 = arith.constant 0 : i32
      %205 = tpu.memref_slice %arg5[%c0_i32_146, %c0_i32_147] : memref<32x128xf32, #tpu.memory_space<vmem>> -> memref<1x128xf32, #tpu.memory_space<vmem>>
      %c0_i32_148 = arith.constant 0 : i32
      %c0_i32_149 = arith.constant 0 : i32
      %206 = tpu.memref_slice %arg4[%c0_i32_148, %c0_i32_149] : memref<32x128xf32, #tpu.memory_space<any>> -> memref<1x128xf32, #tpu.memory_space<any>>
      %207 = tpu.memref_slice %arg7[%3, %c10_i32_145] : memref<2x16x!tpu.dma_semaphore, #tpu.memory_space<semaphore_mem>> -> memref<1x1x!tpu.dma_semaphore, #tpu.memory_space<semaphore_mem>>
      %208 = tpu.memref_squeeze %207 : memref<1x1x!tpu.dma_semaphore, #tpu.memory_space<semaphore_mem>> -> memref<!tpu.dma_semaphore, #tpu.memory_space<semaphore_mem>>
      tpu.wait_dma2 semaphore(%208 : memref<!tpu.dma_semaphore, #tpu.memory_space<semaphore_mem>>) src(%205 : memref<1x128xf32, #tpu.memory_space<vmem>>) dst(%206 : memref<1x128xf32, #tpu.memory_space<any>>)
      %c11_i32_150 = arith.constant 11 : i32
      %c0_i32_151 = arith.constant 0 : i32
      %c0_i32_152 = arith.constant 0 : i32
      %209 = tpu.memref_slice %arg5[%c0_i32_151, %c0_i32_152] : memref<32x128xf32, #tpu.memory_space<vmem>> -> memref<1x128xf32, #tpu.memory_space<vmem>>
      %c0_i32_153 = arith.constant 0 : i32
      %c0_i32_154 = arith.constant 0 : i32
      %210 = tpu.memref_slice %arg4[%c0_i32_153, %c0_i32_154] : memref<32x128xf32, #tpu.memory_space<any>> -> memref<1x128xf32, #tpu.memory_space<any>>
      %211 = tpu.memref_slice %arg7[%3, %c11_i32_150] : memref<2x16x!tpu.dma_semaphore, #tpu.memory_space<semaphore_mem>> -> memref<1x1x!tpu.dma_semaphore, #tpu.memory_space<semaphore_mem>>
      %212 = tpu.memref_squeeze %211 : memref<1x1x!tpu.dma_semaphore, #tpu.memory_space<semaphore_mem>> -> memref<!tpu.dma_semaphore, #tpu.memory_space<semaphore_mem>>
      tpu.wait_dma2 semaphore(%212 : memref<!tpu.dma_semaphore, #tpu.memory_space<semaphore_mem>>) src(%209 : memref<1x128xf32, #tpu.memory_space<vmem>>) dst(%210 : memref<1x128xf32, #tpu.memory_space<any>>)
      %c12_i32_155 = arith.constant 12 : i32
      %c0_i32_156 = arith.constant 0 : i32
      %c0_i32_157 = arith.constant 0 : i32
      %213 = tpu.memref_slice %arg5[%c0_i32_156, %c0_i32_157] : memref<32x128xf32, #tpu.memory_space<vmem>> -> memref<1x128xf32, #tpu.memory_space<vmem>>
      %c0_i32_158 = arith.constant 0 : i32
      %c0_i32_159 = arith.constant 0 : i32
      %214 = tpu.memref_slice %arg4[%c0_i32_158, %c0_i32_159] : memref<32x128xf32, #tpu.memory_space<any>> -> memref<1x128xf32, #tpu.memory_space<any>>
      %215 = tpu.memref_slice %arg7[%3, %c12_i32_155] : memref<2x16x!tpu.dma_semaphore, #tpu.memory_space<semaphore_mem>> -> memref<1x1x!tpu.dma_semaphore, #tpu.memory_space<semaphore_mem>>
      %216 = tpu.memref_squeeze %215 : memref<1x1x!tpu.dma_semaphore, #tpu.memory_space<semaphore_mem>> -> memref<!tpu.dma_semaphore, #tpu.memory_space<semaphore_mem>>
      tpu.wait_dma2 semaphore(%216 : memref<!tpu.dma_semaphore, #tpu.memory_space<semaphore_mem>>) src(%213 : memref<1x128xf32, #tpu.memory_space<vmem>>) dst(%214 : memref<1x128xf32, #tpu.memory_space<any>>)
      %c13_i32_160 = arith.constant 13 : i32
      %c0_i32_161 = arith.constant 0 : i32
      %c0_i32_162 = arith.constant 0 : i32
      %217 = tpu.memref_slice %arg5[%c0_i32_161, %c0_i32_162] : memref<32x128xf32, #tpu.memory_space<vmem>> -> memref<1x128xf32, #tpu.memory_space<vmem>>
      %c0_i32_163 = arith.constant 0 : i32
      %c0_i32_164 = arith.constant 0 : i32
      %218 = tpu.memref_slice %arg4[%c0_i32_163, %c0_i32_164] : memref<32x128xf32, #tpu.memory_space<any>> -> memref<1x128xf32, #tpu.memory_space<any>>
      %219 = tpu.memref_slice %arg7[%3, %c13_i32_160] : memref<2x16x!tpu.dma_semaphore, #tpu.memory_space<semaphore_mem>> -> memref<1x1x!tpu.dma_semaphore, #tpu.memory_space<semaphore_mem>>
      %220 = tpu.memref_squeeze %219 : memref<1x1x!tpu.dma_semaphore, #tpu.memory_space<semaphore_mem>> -> memref<!tpu.dma_semaphore, #tpu.memory_space<semaphore_mem>>
      tpu.wait_dma2 semaphore(%220 : memref<!tpu.dma_semaphore, #tpu.memory_space<semaphore_mem>>) src(%217 : memref<1x128xf32, #tpu.memory_space<vmem>>) dst(%218 : memref<1x128xf32, #tpu.memory_space<any>>)
      %c14_i32_165 = arith.constant 14 : i32
      %c0_i32_166 = arith.constant 0 : i32
      %c0_i32_167 = arith.constant 0 : i32
      %221 = tpu.memref_slice %arg5[%c0_i32_166, %c0_i32_167] : memref<32x128xf32, #tpu.memory_space<vmem>> -> memref<1x128xf32, #tpu.memory_space<vmem>>
      %c0_i32_168 = arith.constant 0 : i32
      %c0_i32_169 = arith.constant 0 : i32
      %222 = tpu.memref_slice %arg4[%c0_i32_168, %c0_i32_169] : memref<32x128xf32, #tpu.memory_space<any>> -> memref<1x128xf32, #tpu.memory_space<any>>
      %223 = tpu.memref_slice %arg7[%3, %c14_i32_165] : memref<2x16x!tpu.dma_semaphore, #tpu.memory_space<semaphore_mem>> -> memref<1x1x!tpu.dma_semaphore, #tpu.memory_space<semaphore_mem>>
      %224 = tpu.memref_squeeze %223 : memref<1x1x!tpu.dma_semaphore, #tpu.memory_space<semaphore_mem>> -> memref<!tpu.dma_semaphore, #tpu.memory_space<semaphore_mem>>
      tpu.wait_dma2 semaphore(%224 : memref<!tpu.dma_semaphore, #tpu.memory_space<semaphore_mem>>) src(%221 : memref<1x128xf32, #tpu.memory_space<vmem>>) dst(%222 : memref<1x128xf32, #tpu.memory_space<any>>)
      %c15_i32_170 = arith.constant 15 : i32
      %c0_i32_171 = arith.constant 0 : i32
      %c0_i32_172 = arith.constant 0 : i32
      %225 = tpu.memref_slice %arg5[%c0_i32_171, %c0_i32_172] : memref<32x128xf32, #tpu.memory_space<vmem>> -> memref<1x128xf32, #tpu.memory_space<vmem>>
      %c0_i32_173 = arith.constant 0 : i32
      %c0_i32_174 = arith.constant 0 : i32
      %226 = tpu.memref_slice %arg4[%c0_i32_173, %c0_i32_174] : memref<32x128xf32, #tpu.memory_space<any>> -> memref<1x128xf32, #tpu.memory_space<any>>
      %227 = tpu.memref_slice %arg7[%3, %c15_i32_170] : memref<2x16x!tpu.dma_semaphore, #tpu.memory_space<semaphore_mem>> -> memref<1x1x!tpu.dma_semaphore, #tpu.memory_space<semaphore_mem>>
      %228 = tpu.memref_squeeze %227 : memref<1x1x!tpu.dma_semaphore, #tpu.memory_space<semaphore_mem>> -> memref<!tpu.dma_semaphore, #tpu.memory_space<semaphore_mem>>
      tpu.wait_dma2 semaphore(%228 : memref<!tpu.dma_semaphore, #tpu.memory_space<semaphore_mem>>) src(%225 : memref<1x128xf32, #tpu.memory_space<vmem>>) dst(%226 : memref<1x128xf32, #tpu.memory_space<any>>)
    } else {
    }
    %c0_i32_4 = arith.constant 0 : i32
    %55 = arith.cmpi eq, %arg0, %c0_i32_4 : i32
    %56 = arith.extui %55 : i1 to i32
    %c0_i32_5 = arith.constant 0 : i32
    %57 = arith.cmpi ne, %56, %c0_i32_5 : i32
    scf.if %57 {
      %c0_i32_95 = arith.constant 0 : i32
      %c0_i32_96 = arith.constant 0 : i32
      %c0_i32_97 = arith.constant 0 : i32
      %165 = tpu.memref_slice %arg2[%c0_i32_96, %c0_i32_97] : memref<32x128xf32, #tpu.memory_space<any>> -> memref<16x128xf32, #tpu.memory_space<any>>
      %c0_i32_98 = arith.constant 0 : i32
      %c0_i32_99 = arith.constant 0 : i32
      %166 = tpu.memref_slice %arg5[%c0_i32_98, %c0_i32_99] : memref<32x128xf32, #tpu.memory_space<vmem>> -> memref<16x128xf32, #tpu.memory_space<vmem>>
      %167 = tpu.memref_slice %arg6[%c0_i32_95] : memref<2x!tpu.dma_semaphore, #tpu.memory_space<semaphore_mem>> -> memref<1x!tpu.dma_semaphore, #tpu.memory_space<semaphore_mem>>
      %168 = tpu.memref_squeeze %167 : memref<1x!tpu.dma_semaphore, #tpu.memory_space<semaphore_mem>> -> memref<!tpu.dma_semaphore, #tpu.memory_space<semaphore_mem>>
      tpu.enqueue_dma source(%165 : memref<16x128xf32, #tpu.memory_space<any>>) target(%166 : memref<16x128xf32, #tpu.memory_space<vmem>>) target_semaphore(%168 : memref<!tpu.dma_semaphore, #tpu.memory_space<semaphore_mem>>)
    } else {
    }
    %c1_i32_6 = arith.constant 1 : i32
    %58 = arith.addi %arg0, %c1_i32_6 : i32
    %c2_i32_7 = arith.constant 2 : i32
    %59 = arith.cmpi slt, %58, %c2_i32_7 : i32
    %60 = arith.extui %59 : i1 to i32
    %c0_i32_8 = arith.constant 0 : i32
    %61 = arith.cmpi ne, %60, %c0_i32_8 : i32
    scf.if %61 {
      %c1_i32_95 = arith.constant 1 : i32
      %165 = arith.addi %arg0, %c1_i32_95 : i32
      %c16_i32_96 = arith.constant 16 : i32
      %166 = arith.muli %165, %c16_i32_96 : i32
      %167 = tpu.assume_multiple %166, 16 : i32
      %c16_i32_97 = arith.constant 16 : i32
      %168 = arith.muli %3, %c16_i32_97 : i32
      %169 = tpu.assume_multiple %168, 16 : i32
      %c0_i32_98 = arith.constant 0 : i32
      %170 = tpu.memref_slice %arg2[%167, %c0_i32_98] : memref<32x128xf32, #tpu.memory_space<any>> -> memref<16x128xf32, #tpu.memory_space<any>>
      %c0_i32_99 = arith.constant 0 : i32
      %171 = tpu.memref_slice %arg5[%169, %c0_i32_99] : memref<32x128xf32, #tpu.memory_space<vmem>> -> memref<16x128xf32, #tpu.memory_space<vmem>>
      %172 = tpu.memref_slice %arg6[%3] : memref<2x!tpu.dma_semaphore, #tpu.memory_space<semaphore_mem>> -> memref<1x!tpu.dma_semaphore, #tpu.memory_space<semaphore_mem>>
      %173 = tpu.memref_squeeze %172 : memref<1x!tpu.dma_semaphore, #tpu.memory_space<semaphore_mem>> -> memref<!tpu.dma_semaphore, #tpu.memory_space<semaphore_mem>>
      tpu.enqueue_dma source(%170 : memref<16x128xf32, #tpu.memory_space<any>>) target(%171 : memref<16x128xf32, #tpu.memory_space<vmem>>) target_semaphore(%173 : memref<!tpu.dma_semaphore, #tpu.memory_space<semaphore_mem>>)
    } else {
    }
    %c0_i32_9 = arith.constant 0 : i32
    %c0_i32_10 = arith.constant 0 : i32
    %62 = tpu.memref_slice %arg2[%c0_i32_9, %c0_i32_10] : memref<32x128xf32, #tpu.memory_space<any>> -> memref<16x128xf32, #tpu.memory_space<any>>
    %c0_i32_11 = arith.constant 0 : i32
    %c0_i32_12 = arith.constant 0 : i32
    %63 = tpu.memref_slice %arg5[%c0_i32_11, %c0_i32_12] : memref<32x128xf32, #tpu.memory_space<vmem>> -> memref<16x128xf32, #tpu.memory_space<vmem>>
    %64 = tpu.memref_slice %arg6[%2] : memref<2x!tpu.dma_semaphore, #tpu.memory_space<semaphore_mem>> -> memref<1x!tpu.dma_semaphore, #tpu.memory_space<semaphore_mem>>
    %65 = tpu.memref_squeeze %64 : memref<1x!tpu.dma_semaphore, #tpu.memory_space<semaphore_mem>> -> memref<!tpu.dma_semaphore, #tpu.memory_space<semaphore_mem>>
    tpu.wait_dma2 semaphore(%65 : memref<!tpu.dma_semaphore, #tpu.memory_space<semaphore_mem>>) src(%62 : memref<16x128xf32, #tpu.memory_space<any>>) dst(%63 : memref<16x128xf32, #tpu.memory_space<vmem>>)
    %c16_i32_13 = arith.constant 16 : i32
    %66 = arith.muli %2, %c16_i32_13 : i32
    %c0_i32_14 = arith.constant 0 : i32
    %67 = arith.addi %66, %c0_i32_14 : i32
    %c0_i32_15 = arith.constant 0 : i32
    %c0_i32_16 = arith.constant 0 : i32
    %68 = tpu.memref_slice %arg5[%67, %c0_i32_16] : memref<32x128xf32, #tpu.memory_space<vmem>> -> memref<1x128xf32, #tpu.memory_space<vmem>>
    %c0_i32_17 = arith.constant 0 : i32
    %69 = tpu.memref_slice %arg4[%6, %c0_i32_17] : memref<32x128xf32, #tpu.memory_space<any>> -> memref<1x128xf32, #tpu.memory_space<any>>
    %70 = tpu.memref_slice %arg7[%2, %c0_i32_15] : memref<2x16x!tpu.dma_semaphore, #tpu.memory_space<semaphore_mem>> -> memref<1x1x!tpu.dma_semaphore, #tpu.memory_space<semaphore_mem>>
    %71 = tpu.memref_squeeze %70 : memref<1x1x!tpu.dma_semaphore, #tpu.memory_space<semaphore_mem>> -> memref<!tpu.dma_semaphore, #tpu.memory_space<semaphore_mem>>
    tpu.enqueue_dma source(%68 : memref<1x128xf32, #tpu.memory_space<vmem>>) target(%69 : memref<1x128xf32, #tpu.memory_space<any>>) target_semaphore(%71 : memref<!tpu.dma_semaphore, #tpu.memory_space<semaphore_mem>>)
    %c16_i32_18 = arith.constant 16 : i32
    %72 = arith.muli %2, %c16_i32_18 : i32
    %c1_i32_19 = arith.constant 1 : i32
    %73 = arith.addi %72, %c1_i32_19 : i32
    %c1_i32_20 = arith.constant 1 : i32
    %c0_i32_21 = arith.constant 0 : i32
    %74 = tpu.memref_slice %arg5[%73, %c0_i32_21] : memref<32x128xf32, #tpu.memory_space<vmem>> -> memref<1x128xf32, #tpu.memory_space<vmem>>
    %c0_i32_22 = arith.constant 0 : i32
    %75 = tpu.memref_slice %arg4[%9, %c0_i32_22] : memref<32x128xf32, #tpu.memory_space<any>> -> memref<1x128xf32, #tpu.memory_space<any>>
    %76 = tpu.memref_slice %arg7[%2, %c1_i32_20] : memref<2x16x!tpu.dma_semaphore, #tpu.memory_space<semaphore_mem>> -> memref<1x1x!tpu.dma_semaphore, #tpu.memory_space<semaphore_mem>>
    %77 = tpu.memref_squeeze %76 : memref<1x1x!tpu.dma_semaphore, #tpu.memory_space<semaphore_mem>> -> memref<!tpu.dma_semaphore, #tpu.memory_space<semaphore_mem>>
    tpu.enqueue_dma source(%74 : memref<1x128xf32, #tpu.memory_space<vmem>>) target(%75 : memref<1x128xf32, #tpu.memory_space<any>>) target_semaphore(%77 : memref<!tpu.dma_semaphore, #tpu.memory_space<semaphore_mem>>)
    %c16_i32_23 = arith.constant 16 : i32
    %78 = arith.muli %2, %c16_i32_23 : i32
    %c2_i32_24 = arith.constant 2 : i32
    %79 = arith.addi %78, %c2_i32_24 : i32
    %c2_i32_25 = arith.constant 2 : i32
    %c0_i32_26 = arith.constant 0 : i32
    %80 = tpu.memref_slice %arg5[%79, %c0_i32_26] : memref<32x128xf32, #tpu.memory_space<vmem>> -> memref<1x128xf32, #tpu.memory_space<vmem>>
    %c0_i32_27 = arith.constant 0 : i32
    %81 = tpu.memref_slice %arg4[%12, %c0_i32_27] : memref<32x128xf32, #tpu.memory_space<any>> -> memref<1x128xf32, #tpu.memory_space<any>>
    %82 = tpu.memref_slice %arg7[%2, %c2_i32_25] : memref<2x16x!tpu.dma_semaphore, #tpu.memory_space<semaphore_mem>> -> memref<1x1x!tpu.dma_semaphore, #tpu.memory_space<semaphore_mem>>
    %83 = tpu.memref_squeeze %82 : memref<1x1x!tpu.dma_semaphore, #tpu.memory_space<semaphore_mem>> -> memref<!tpu.dma_semaphore, #tpu.memory_space<semaphore_mem>>
    tpu.enqueue_dma source(%80 : memref<1x128xf32, #tpu.memory_space<vmem>>) target(%81 : memref<1x128xf32, #tpu.memory_space<any>>) target_semaphore(%83 : memref<!tpu.dma_semaphore, #tpu.memory_space<semaphore_mem>>)
    %c16_i32_28 = arith.constant 16 : i32
    %84 = arith.muli %2, %c16_i32_28 : i32
    %c3_i32_29 = arith.constant 3 : i32
    %85 = arith.addi %84, %c3_i32_29 : i32
    %c3_i32_30 = arith.constant 3 : i32
    %c0_i32_31 = arith.constant 0 : i32
    %86 = tpu.memref_slice %arg5[%85, %c0_i32_31] : memref<32x128xf32, #tpu.memory_space<vmem>> -> memref<1x128xf32, #tpu.memory_space<vmem>>
    %c0_i32_32 = arith.constant 0 : i32
    %87 = tpu.memref_slice %arg4[%15, %c0_i32_32] : memref<32x128xf32, #tpu.memory_space<any>> -> memref<1x128xf32, #tpu.memory_space<any>>
    %88 = tpu.memref_slice %arg7[%2, %c3_i32_30] : memref<2x16x!tpu.dma_semaphore, #tpu.memory_space<semaphore_mem>> -> memref<1x1x!tpu.dma_semaphore, #tpu.memory_space<semaphore_mem>>
    %89 = tpu.memref_squeeze %88 : memref<1x1x!tpu.dma_semaphore, #tpu.memory_space<semaphore_mem>> -> memref<!tpu.dma_semaphore, #tpu.memory_space<semaphore_mem>>
    tpu.enqueue_dma source(%86 : memref<1x128xf32, #tpu.memory_space<vmem>>) target(%87 : memref<1x128xf32, #tpu.memory_space<any>>) target_semaphore(%89 : memref<!tpu.dma_semaphore, #tpu.memory_space<semaphore_mem>>)
    %c16_i32_33 = arith.constant 16 : i32
    %90 = arith.muli %2, %c16_i32_33 : i32
    %c4_i32_34 = arith.constant 4 : i32
    %91 = arith.addi %90, %c4_i32_34 : i32
    %c4_i32_35 = arith.constant 4 : i32
    %c0_i32_36 = arith.constant 0 : i32
    %92 = tpu.memref_slice %arg5[%91, %c0_i32_36] : memref<32x128xf32, #tpu.memory_space<vmem>> -> memref<1x128xf32, #tpu.memory_space<vmem>>
    %c0_i32_37 = arith.constant 0 : i32
    %93 = tpu.memref_slice %arg4[%18, %c0_i32_37] : memref<32x128xf32, #tpu.memory_space<any>> -> memref<1x128xf32, #tpu.memory_space<any>>
    %94 = tpu.memref_slice %arg7[%2, %c4_i32_35] : memref<2x16x!tpu.dma_semaphore, #tpu.memory_space<semaphore_mem>> -> memref<1x1x!tpu.dma_semaphore, #tpu.memory_space<semaphore_mem>>
    %95 = tpu.memref_squeeze %94 : memref<1x1x!tpu.dma_semaphore, #tpu.memory_space<semaphore_mem>> -> memref<!tpu.dma_semaphore, #tpu.memory_space<semaphore_mem>>
    tpu.enqueue_dma source(%92 : memref<1x128xf32, #tpu.memory_space<vmem>>) target(%93 : memref<1x128xf32, #tpu.memory_space<any>>) target_semaphore(%95 : memref<!tpu.dma_semaphore, #tpu.memory_space<semaphore_mem>>)
    %c16_i32_38 = arith.constant 16 : i32
    %96 = arith.muli %2, %c16_i32_38 : i32
    %c5_i32_39 = arith.constant 5 : i32
    %97 = arith.addi %96, %c5_i32_39 : i32
    %c5_i32_40 = arith.constant 5 : i32
    %c0_i32_41 = arith.constant 0 : i32
    %98 = tpu.memref_slice %arg5[%97, %c0_i32_41] : memref<32x128xf32, #tpu.memory_space<vmem>> -> memref<1x128xf32, #tpu.memory_space<vmem>>
    %c0_i32_42 = arith.constant 0 : i32
    %99 = tpu.memref_slice %arg4[%21, %c0_i32_42] : memref<32x128xf32, #tpu.memory_space<any>> -> memref<1x128xf32, #tpu.memory_space<any>>
    %100 = tpu.memref_slice %arg7[%2, %c5_i32_40] : memref<2x16x!tpu.dma_semaphore, #tpu.memory_space<semaphore_mem>> -> memref<1x1x!tpu.dma_semaphore, #tpu.memory_space<semaphore_mem>>
    %101 = tpu.memref_squeeze %100 : memref<1x1x!tpu.dma_semaphore, #tpu.memory_space<semaphore_mem>> -> memref<!tpu.dma_semaphore, #tpu.memory_space<semaphore_mem>>
    tpu.enqueue_dma source(%98 : memref<1x128xf32, #tpu.memory_space<vmem>>) target(%99 : memref<1x128xf32, #tpu.memory_space<any>>) target_semaphore(%101 : memref<!tpu.dma_semaphore, #tpu.memory_space<semaphore_mem>>)
    %c16_i32_43 = arith.constant 16 : i32
    %102 = arith.muli %2, %c16_i32_43 : i32
    %c6_i32_44 = arith.constant 6 : i32
    %103 = arith.addi %102, %c6_i32_44 : i32
    %c6_i32_45 = arith.constant 6 : i32
    %c0_i32_46 = arith.constant 0 : i32
    %104 = tpu.memref_slice %arg5[%103, %c0_i32_46] : memref<32x128xf32, #tpu.memory_space<vmem>> -> memref<1x128xf32, #tpu.memory_space<vmem>>
    %c0_i32_47 = arith.constant 0 : i32
    %105 = tpu.memref_slice %arg4[%24, %c0_i32_47] : memref<32x128xf32, #tpu.memory_space<any>> -> memref<1x128xf32, #tpu.memory_space<any>>
    %106 = tpu.memref_slice %arg7[%2, %c6_i32_45] : memref<2x16x!tpu.dma_semaphore, #tpu.memory_space<semaphore_mem>> -> memref<1x1x!tpu.dma_semaphore, #tpu.memory_space<semaphore_mem>>
    %107 = tpu.memref_squeeze %106 : memref<1x1x!tpu.dma_semaphore, #tpu.memory_space<semaphore_mem>> -> memref<!tpu.dma_semaphore, #tpu.memory_space<semaphore_mem>>
    tpu.enqueue_dma source(%104 : memref<1x128xf32, #tpu.memory_space<vmem>>) target(%105 : memref<1x128xf32, #tpu.memory_space<any>>) target_semaphore(%107 : memref<!tpu.dma_semaphore, #tpu.memory_space<semaphore_mem>>)
    %c16_i32_48 = arith.constant 16 : i32
    %108 = arith.muli %2, %c16_i32_48 : i32
    %c7_i32_49 = arith.constant 7 : i32
    %109 = arith.addi %108, %c7_i32_49 : i32
    %c7_i32_50 = arith.constant 7 : i32
    %c0_i32_51 = arith.constant 0 : i32
    %110 = tpu.memref_slice %arg5[%109, %c0_i32_51] : memref<32x128xf32, #tpu.memory_space<vmem>> -> memref<1x128xf32, #tpu.memory_space<vmem>>
    %c0_i32_52 = arith.constant 0 : i32
    %111 = tpu.memref_slice %arg4[%27, %c0_i32_52] : memref<32x128xf32, #tpu.memory_space<any>> -> memref<1x128xf32, #tpu.memory_space<any>>
    %112 = tpu.memref_slice %arg7[%2, %c7_i32_50] : memref<2x16x!tpu.dma_semaphore, #tpu.memory_space<semaphore_mem>> -> memref<1x1x!tpu.dma_semaphore, #tpu.memory_space<semaphore_mem>>
    %113 = tpu.memref_squeeze %112 : memref<1x1x!tpu.dma_semaphore, #tpu.memory_space<semaphore_mem>> -> memref<!tpu.dma_semaphore, #tpu.memory_space<semaphore_mem>>
    tpu.enqueue_dma source(%110 : memref<1x128xf32, #tpu.memory_space<vmem>>) target(%111 : memref<1x128xf32, #tpu.memory_space<any>>) target_semaphore(%113 : memref<!tpu.dma_semaphore, #tpu.memory_space<semaphore_mem>>)
    %c16_i32_53 = arith.constant 16 : i32
    %114 = arith.muli %2, %c16_i32_53 : i32
    %c8_i32_54 = arith.constant 8 : i32
    %115 = arith.addi %114, %c8_i32_54 : i32
    %c8_i32_55 = arith.constant 8 : i32
    %c0_i32_56 = arith.constant 0 : i32
    %116 = tpu.memref_slice %arg5[%115, %c0_i32_56] : memref<32x128xf32, #tpu.memory_space<vmem>> -> memref<1x128xf32, #tpu.memory_space<vmem>>
    %c0_i32_57 = arith.constant 0 : i32
    %117 = tpu.memref_slice %arg4[%30, %c0_i32_57] : memref<32x128xf32, #tpu.memory_space<any>> -> memref<1x128xf32, #tpu.memory_space<any>>
    %118 = tpu.memref_slice %arg7[%2, %c8_i32_55] : memref<2x16x!tpu.dma_semaphore, #tpu.memory_space<semaphore_mem>> -> memref<1x1x!tpu.dma_semaphore, #tpu.memory_space<semaphore_mem>>
    %119 = tpu.memref_squeeze %118 : memref<1x1x!tpu.dma_semaphore, #tpu.memory_space<semaphore_mem>> -> memref<!tpu.dma_semaphore, #tpu.memory_space<semaphore_mem>>
    tpu.enqueue_dma source(%116 : memref<1x128xf32, #tpu.memory_space<vmem>>) target(%117 : memref<1x128xf32, #tpu.memory_space<any>>) target_semaphore(%119 : memref<!tpu.dma_semaphore, #tpu.memory_space<semaphore_mem>>)
    %c16_i32_58 = arith.constant 16 : i32
    %120 = arith.muli %2, %c16_i32_58 : i32
    %c9_i32_59 = arith.constant 9 : i32
    %121 = arith.addi %120, %c9_i32_59 : i32
    %c9_i32_60 = arith.constant 9 : i32
    %c0_i32_61 = arith.constant 0 : i32
    %122 = tpu.memref_slice %arg5[%121, %c0_i32_61] : memref<32x128xf32, #tpu.memory_space<vmem>> -> memref<1x128xf32, #tpu.memory_space<vmem>>
    %c0_i32_62 = arith.constant 0 : i32
    %123 = tpu.memref_slice %arg4[%33, %c0_i32_62] : memref<32x128xf32, #tpu.memory_space<any>> -> memref<1x128xf32, #tpu.memory_space<any>>
    %124 = tpu.memref_slice %arg7[%2, %c9_i32_60] : memref<2x16x!tpu.dma_semaphore, #tpu.memory_space<semaphore_mem>> -> memref<1x1x!tpu.dma_semaphore, #tpu.memory_space<semaphore_mem>>
    %125 = tpu.memref_squeeze %124 : memref<1x1x!tpu.dma_semaphore, #tpu.memory_space<semaphore_mem>> -> memref<!tpu.dma_semaphore, #tpu.memory_space<semaphore_mem>>
    tpu.enqueue_dma source(%122 : memref<1x128xf32, #tpu.memory_space<vmem>>) target(%123 : memref<1x128xf32, #tpu.memory_space<any>>) target_semaphore(%125 : memref<!tpu.dma_semaphore, #tpu.memory_space<semaphore_mem>>)
    %c16_i32_63 = arith.constant 16 : i32
    %126 = arith.muli %2, %c16_i32_63 : i32
    %c10_i32_64 = arith.constant 10 : i32
    %127 = arith.addi %126, %c10_i32_64 : i32
    %c10_i32_65 = arith.constant 10 : i32
    %c0_i32_66 = arith.constant 0 : i32
    %128 = tpu.memref_slice %arg5[%127, %c0_i32_66] : memref<32x128xf32, #tpu.memory_space<vmem>> -> memref<1x128xf32, #tpu.memory_space<vmem>>
    %c0_i32_67 = arith.constant 0 : i32
    %129 = tpu.memref_slice %arg4[%36, %c0_i32_67] : memref<32x128xf32, #tpu.memory_space<any>> -> memref<1x128xf32, #tpu.memory_space<any>>
    %130 = tpu.memref_slice %arg7[%2, %c10_i32_65] : memref<2x16x!tpu.dma_semaphore, #tpu.memory_space<semaphore_mem>> -> memref<1x1x!tpu.dma_semaphore, #tpu.memory_space<semaphore_mem>>
    %131 = tpu.memref_squeeze %130 : memref<1x1x!tpu.dma_semaphore, #tpu.memory_space<semaphore_mem>> -> memref<!tpu.dma_semaphore, #tpu.memory_space<semaphore_mem>>
    tpu.enqueue_dma source(%128 : memref<1x128xf32, #tpu.memory_space<vmem>>) target(%129 : memref<1x128xf32, #tpu.memory_space<any>>) target_semaphore(%131 : memref<!tpu.dma_semaphore, #tpu.memory_space<semaphore_mem>>)
    %c16_i32_68 = arith.constant 16 : i32
    %132 = arith.muli %2, %c16_i32_68 : i32
    %c11_i32_69 = arith.constant 11 : i32
    %133 = arith.addi %132, %c11_i32_69 : i32
    %c11_i32_70 = arith.constant 11 : i32
    %c0_i32_71 = arith.constant 0 : i32
    %134 = tpu.memref_slice %arg5[%133, %c0_i32_71] : memref<32x128xf32, #tpu.memory_space<vmem>> -> memref<1x128xf32, #tpu.memory_space<vmem>>
    %c0_i32_72 = arith.constant 0 : i32
    %135 = tpu.memref_slice %arg4[%39, %c0_i32_72] : memref<32x128xf32, #tpu.memory_space<any>> -> memref<1x128xf32, #tpu.memory_space<any>>
    %136 = tpu.memref_slice %arg7[%2, %c11_i32_70] : memref<2x16x!tpu.dma_semaphore, #tpu.memory_space<semaphore_mem>> -> memref<1x1x!tpu.dma_semaphore, #tpu.memory_space<semaphore_mem>>
    %137 = tpu.memref_squeeze %136 : memref<1x1x!tpu.dma_semaphore, #tpu.memory_space<semaphore_mem>> -> memref<!tpu.dma_semaphore, #tpu.memory_space<semaphore_mem>>
    tpu.enqueue_dma source(%134 : memref<1x128xf32, #tpu.memory_space<vmem>>) target(%135 : memref<1x128xf32, #tpu.memory_space<any>>) target_semaphore(%137 : memref<!tpu.dma_semaphore, #tpu.memory_space<semaphore_mem>>)
    %c16_i32_73 = arith.constant 16 : i32
    %138 = arith.muli %2, %c16_i32_73 : i32
    %c12_i32_74 = arith.constant 12 : i32
    %139 = arith.addi %138, %c12_i32_74 : i32
    %c12_i32_75 = arith.constant 12 : i32
    %c0_i32_76 = arith.constant 0 : i32
    %140 = tpu.memref_slice %arg5[%139, %c0_i32_76] : memref<32x128xf32, #tpu.memory_space<vmem>> -> memref<1x128xf32, #tpu.memory_space<vmem>>
    %c0_i32_77 = arith.constant 0 : i32
    %141 = tpu.memref_slice %arg4[%42, %c0_i32_77] : memref<32x128xf32, #tpu.memory_space<any>> -> memref<1x128xf32, #tpu.memory_space<any>>
    %142 = tpu.memref_slice %arg7[%2, %c12_i32_75] : memref<2x16x!tpu.dma_semaphore, #tpu.memory_space<semaphore_mem>> -> memref<1x1x!tpu.dma_semaphore, #tpu.memory_space<semaphore_mem>>
    %143 = tpu.memref_squeeze %142 : memref<1x1x!tpu.dma_semaphore, #tpu.memory_space<semaphore_mem>> -> memref<!tpu.dma_semaphore, #tpu.memory_space<semaphore_mem>>
    tpu.enqueue_dma source(%140 : memref<1x128xf32, #tpu.memory_space<vmem>>) target(%141 : memref<1x128xf32, #tpu.memory_space<any>>) target_semaphore(%143 : memref<!tpu.dma_semaphore, #tpu.memory_space<semaphore_mem>>)
    %c16_i32_78 = arith.constant 16 : i32
    %144 = arith.muli %2, %c16_i32_78 : i32
    %c13_i32_79 = arith.constant 13 : i32
    %145 = arith.addi %144, %c13_i32_79 : i32
    %c13_i32_80 = arith.constant 13 : i32
    %c0_i32_81 = arith.constant 0 : i32
    %146 = tpu.memref_slice %arg5[%145, %c0_i32_81] : memref<32x128xf32, #tpu.memory_space<vmem>> -> memref<1x128xf32, #tpu.memory_space<vmem>>
    %c0_i32_82 = arith.constant 0 : i32
    %147 = tpu.memref_slice %arg4[%45, %c0_i32_82] : memref<32x128xf32, #tpu.memory_space<any>> -> memref<1x128xf32, #tpu.memory_space<any>>
    %148 = tpu.memref_slice %arg7[%2, %c13_i32_80] : memref<2x16x!tpu.dma_semaphore, #tpu.memory_space<semaphore_mem>> -> memref<1x1x!tpu.dma_semaphore, #tpu.memory_space<semaphore_mem>>
    %149 = tpu.memref_squeeze %148 : memref<1x1x!tpu.dma_semaphore, #tpu.memory_space<semaphore_mem>> -> memref<!tpu.dma_semaphore, #tpu.memory_space<semaphore_mem>>
    tpu.enqueue_dma source(%146 : memref<1x128xf32, #tpu.memory_space<vmem>>) target(%147 : memref<1x128xf32, #tpu.memory_space<any>>) target_semaphore(%149 : memref<!tpu.dma_semaphore, #tpu.memory_space<semaphore_mem>>)
    %c16_i32_83 = arith.constant 16 : i32
    %150 = arith.muli %2, %c16_i32_83 : i32
    %c14_i32_84 = arith.constant 14 : i32
    %151 = arith.addi %150, %c14_i32_84 : i32
    %c14_i32_85 = arith.constant 14 : i32
    %c0_i32_86 = arith.constant 0 : i32
    %152 = tpu.memref_slice %arg5[%151, %c0_i32_86] : memref<32x128xf32, #tpu.memory_space<vmem>> -> memref<1x128xf32, #tpu.memory_space<vmem>>
    %c0_i32_87 = arith.constant 0 : i32
    %153 = tpu.memref_slice %arg4[%48, %c0_i32_87] : memref<32x128xf32, #tpu.memory_space<any>> -> memref<1x128xf32, #tpu.memory_space<any>>
    %154 = tpu.memref_slice %arg7[%2, %c14_i32_85] : memref<2x16x!tpu.dma_semaphore, #tpu.memory_space<semaphore_mem>> -> memref<1x1x!tpu.dma_semaphore, #tpu.memory_space<semaphore_mem>>
    %155 = tpu.memref_squeeze %154 : memref<1x1x!tpu.dma_semaphore, #tpu.memory_space<semaphore_mem>> -> memref<!tpu.dma_semaphore, #tpu.memory_space<semaphore_mem>>
    tpu.enqueue_dma source(%152 : memref<1x128xf32, #tpu.memory_space<vmem>>) target(%153 : memref<1x128xf32, #tpu.memory_space<any>>) target_semaphore(%155 : memref<!tpu.dma_semaphore, #tpu.memory_space<semaphore_mem>>)
    %c16_i32_88 = arith.constant 16 : i32
    %156 = arith.muli %2, %c16_i32_88 : i32
    %c15_i32_89 = arith.constant 15 : i32
    %157 = arith.addi %156, %c15_i32_89 : i32
    %c15_i32_90 = arith.constant 15 : i32
    %c0_i32_91 = arith.constant 0 : i32
    %158 = tpu.memref_slice %arg5[%157, %c0_i32_91] : memref<32x128xf32, #tpu.memory_space<vmem>> -> memref<1x128xf32, #tpu.memory_space<vmem>>
    %c0_i32_92 = arith.constant 0 : i32
    %159 = tpu.memref_slice %arg4[%51, %c0_i32_92] : memref<32x128xf32, #tpu.memory_space<any>> -> memref<1x128xf32, #tpu.memory_space<any>>
    %160 = tpu.memref_slice %arg7[%2, %c15_i32_90] : memref<2x16x!tpu.dma_semaphore, #tpu.memory_space<semaphore_mem>> -> memref<1x1x!tpu.dma_semaphore, #tpu.memory_space<semaphore_mem>>
    %161 = tpu.memref_squeeze %160 : memref<1x1x!tpu.dma_semaphore, #tpu.memory_space<semaphore_mem>> -> memref<!tpu.dma_semaphore, #tpu.memory_space<semaphore_mem>>
    tpu.enqueue_dma source(%158 : memref<1x128xf32, #tpu.memory_space<vmem>>) target(%159 : memref<1x128xf32, #tpu.memory_space<any>>) target_semaphore(%161 : memref<!tpu.dma_semaphore, #tpu.memory_space<semaphore_mem>>)
    %c1_i32_93 = arith.constant 1 : i32
    %162 = arith.cmpi eq, %arg0, %c1_i32_93 : i32
    %163 = arith.extui %162 : i1 to i32
    %c0_i32_94 = arith.constant 0 : i32
    %164 = arith.cmpi ne, %163, %c0_i32_94 : i32
    scf.if %164 {
      %c0_i32_95 = arith.constant 0 : i32
      %c0_i32_96 = arith.constant 0 : i32
      %c0_i32_97 = arith.constant 0 : i32
      %165 = tpu.memref_slice %arg5[%c0_i32_96, %c0_i32_97] : memref<32x128xf32, #tpu.memory_space<vmem>> -> memref<1x128xf32, #tpu.memory_space<vmem>>
      %c0_i32_98 = arith.constant 0 : i32
      %c0_i32_99 = arith.constant 0 : i32
      %166 = tpu.memref_slice %arg4[%c0_i32_98, %c0_i32_99] : memref<32x128xf32, #tpu.memory_space<any>> -> memref<1x128xf32, #tpu.memory_space<any>>
      %167 = tpu.memref_slice %arg7[%2, %c0_i32_95] : memref<2x16x!tpu.dma_semaphore, #tpu.memory_space<semaphore_mem>> -> memref<1x1x!tpu.dma_semaphore, #tpu.memory_space<semaphore_mem>>
      %168 = tpu.memref_squeeze %167 : memref<1x1x!tpu.dma_semaphore, #tpu.memory_space<semaphore_mem>> -> memref<!tpu.dma_semaphore, #tpu.memory_space<semaphore_mem>>
      tpu.wait_dma2 semaphore(%168 : memref<!tpu.dma_semaphore, #tpu.memory_space<semaphore_mem>>) src(%165 : memref<1x128xf32, #tpu.memory_space<vmem>>) dst(%166 : memref<1x128xf32, #tpu.memory_space<any>>)
      %c1_i32_100 = arith.constant 1 : i32
      %c0_i32_101 = arith.constant 0 : i32
      %c0_i32_102 = arith.constant 0 : i32
      %169 = tpu.memref_slice %arg5[%c0_i32_101, %c0_i32_102] : memref<32x128xf32, #tpu.memory_space<vmem>> -> memref<1x128xf32, #tpu.memory_space<vmem>>
      %c0_i32_103 = arith.constant 0 : i32
      %c0_i32_104 = arith.constant 0 : i32
      %170 = tpu.memref_slice %arg4[%c0_i32_103, %c0_i32_104] : memref<32x128xf32, #tpu.memory_space<any>> -> memref<1x128xf32, #tpu.memory_space<any>>
      %171 = tpu.memref_slice %arg7[%2, %c1_i32_100] : memref<2x16x!tpu.dma_semaphore, #tpu.memory_space<semaphore_mem>> -> memref<1x1x!tpu.dma_semaphore, #tpu.memory_space<semaphore_mem>>
      %172 = tpu.memref_squeeze %171 : memref<1x1x!tpu.dma_semaphore, #tpu.memory_space<semaphore_mem>> -> memref<!tpu.dma_semaphore, #tpu.memory_space<semaphore_mem>>
      tpu.wait_dma2 semaphore(%172 : memref<!tpu.dma_semaphore, #tpu.memory_space<semaphore_mem>>) src(%169 : memref<1x128xf32, #tpu.memory_space<vmem>>) dst(%170 : memref<1x128xf32, #tpu.memory_space<any>>)
      %c2_i32_105 = arith.constant 2 : i32
      %c0_i32_106 = arith.constant 0 : i32
      %c0_i32_107 = arith.constant 0 : i32
      %173 = tpu.memref_slice %arg5[%c0_i32_106, %c0_i32_107] : memref<32x128xf32, #tpu.memory_space<vmem>> -> memref<1x128xf32, #tpu.memory_space<vmem>>
      %c0_i32_108 = arith.constant 0 : i32
      %c0_i32_109 = arith.constant 0 : i32
      %174 = tpu.memref_slice %arg4[%c0_i32_108, %c0_i32_109] : memref<32x128xf32, #tpu.memory_space<any>> -> memref<1x128xf32, #tpu.memory_space<any>>
      %175 = tpu.memref_slice %arg7[%2, %c2_i32_105] : memref<2x16x!tpu.dma_semaphore, #tpu.memory_space<semaphore_mem>> -> memref<1x1x!tpu.dma_semaphore, #tpu.memory_space<semaphore_mem>>
      %176 = tpu.memref_squeeze %175 : memref<1x1x!tpu.dma_semaphore, #tpu.memory_space<semaphore_mem>> -> memref<!tpu.dma_semaphore, #tpu.memory_space<semaphore_mem>>
      tpu.wait_dma2 semaphore(%176 : memref<!tpu.dma_semaphore, #tpu.memory_space<semaphore_mem>>) src(%173 : memref<1x128xf32, #tpu.memory_space<vmem>>) dst(%174 : memref<1x128xf32, #tpu.memory_space<any>>)
      %c3_i32_110 = arith.constant 3 : i32
      %c0_i32_111 = arith.constant 0 : i32
      %c0_i32_112 = arith.constant 0 : i32
      %177 = tpu.memref_slice %arg5[%c0_i32_111, %c0_i32_112] : memref<32x128xf32, #tpu.memory_space<vmem>> -> memref<1x128xf32, #tpu.memory_space<vmem>>
      %c0_i32_113 = arith.constant 0 : i32
      %c0_i32_114 = arith.constant 0 : i32
      %178 = tpu.memref_slice %arg4[%c0_i32_113, %c0_i32_114] : memref<32x128xf32, #tpu.memory_space<any>> -> memref<1x128xf32, #tpu.memory_space<any>>
      %179 = tpu.memref_slice %arg7[%2, %c3_i32_110] : memref<2x16x!tpu.dma_semaphore, #tpu.memory_space<semaphore_mem>> -> memref<1x1x!tpu.dma_semaphore, #tpu.memory_space<semaphore_mem>>
      %180 = tpu.memref_squeeze %179 : memref<1x1x!tpu.dma_semaphore, #tpu.memory_space<semaphore_mem>> -> memref<!tpu.dma_semaphore, #tpu.memory_space<semaphore_mem>>
      tpu.wait_dma2 semaphore(%180 : memref<!tpu.dma_semaphore, #tpu.memory_space<semaphore_mem>>) src(%177 : memref<1x128xf32, #tpu.memory_space<vmem>>) dst(%178 : memref<1x128xf32, #tpu.memory_space<any>>)
      %c4_i32_115 = arith.constant 4 : i32
      %c0_i32_116 = arith.constant 0 : i32
      %c0_i32_117 = arith.constant 0 : i32
      %181 = tpu.memref_slice %arg5[%c0_i32_116, %c0_i32_117] : memref<32x128xf32, #tpu.memory_space<vmem>> -> memref<1x128xf32, #tpu.memory_space<vmem>>
      %c0_i32_118 = arith.constant 0 : i32
      %c0_i32_119 = arith.constant 0 : i32
      %182 = tpu.memref_slice %arg4[%c0_i32_118, %c0_i32_119] : memref<32x128xf32, #tpu.memory_space<any>> -> memref<1x128xf32, #tpu.memory_space<any>>
      %183 = tpu.memref_slice %arg7[%2, %c4_i32_115] : memref<2x16x!tpu.dma_semaphore, #tpu.memory_space<semaphore_mem>> -> memref<1x1x!tpu.dma_semaphore, #tpu.memory_space<semaphore_mem>>
      %184 = tpu.memref_squeeze %183 : memref<1x1x!tpu.dma_semaphore, #tpu.memory_space<semaphore_mem>> -> memref<!tpu.dma_semaphore, #tpu.memory_space<semaphore_mem>>
      tpu.wait_dma2 semaphore(%184 : memref<!tpu.dma_semaphore, #tpu.memory_space<semaphore_mem>>) src(%181 : memref<1x128xf32, #tpu.memory_space<vmem>>) dst(%182 : memref<1x128xf32, #tpu.memory_space<any>>)
      %c5_i32_120 = arith.constant 5 : i32
      %c0_i32_121 = arith.constant 0 : i32
      %c0_i32_122 = arith.constant 0 : i32
      %185 = tpu.memref_slice %arg5[%c0_i32_121, %c0_i32_122] : memref<32x128xf32, #tpu.memory_space<vmem>> -> memref<1x128xf32, #tpu.memory_space<vmem>>
      %c0_i32_123 = arith.constant 0 : i32
      %c0_i32_124 = arith.constant 0 : i32
      %186 = tpu.memref_slice %arg4[%c0_i32_123, %c0_i32_124] : memref<32x128xf32, #tpu.memory_space<any>> -> memref<1x128xf32, #tpu.memory_space<any>>
      %187 = tpu.memref_slice %arg7[%2, %c5_i32_120] : memref<2x16x!tpu.dma_semaphore, #tpu.memory_space<semaphore_mem>> -> memref<1x1x!tpu.dma_semaphore, #tpu.memory_space<semaphore_mem>>
      %188 = tpu.memref_squeeze %187 : memref<1x1x!tpu.dma_semaphore, #tpu.memory_space<semaphore_mem>> -> memref<!tpu.dma_semaphore, #tpu.memory_space<semaphore_mem>>
      tpu.wait_dma2 semaphore(%188 : memref<!tpu.dma_semaphore, #tpu.memory_space<semaphore_mem>>) src(%185 : memref<1x128xf32, #tpu.memory_space<vmem>>) dst(%186 : memref<1x128xf32, #tpu.memory_space<any>>)
      %c6_i32_125 = arith.constant 6 : i32
      %c0_i32_126 = arith.constant 0 : i32
      %c0_i32_127 = arith.constant 0 : i32
      %189 = tpu.memref_slice %arg5[%c0_i32_126, %c0_i32_127] : memref<32x128xf32, #tpu.memory_space<vmem>> -> memref<1x128xf32, #tpu.memory_space<vmem>>
      %c0_i32_128 = arith.constant 0 : i32
      %c0_i32_129 = arith.constant 0 : i32
      %190 = tpu.memref_slice %arg4[%c0_i32_128, %c0_i32_129] : memref<32x128xf32, #tpu.memory_space<any>> -> memref<1x128xf32, #tpu.memory_space<any>>
      %191 = tpu.memref_slice %arg7[%2, %c6_i32_125] : memref<2x16x!tpu.dma_semaphore, #tpu.memory_space<semaphore_mem>> -> memref<1x1x!tpu.dma_semaphore, #tpu.memory_space<semaphore_mem>>
      %192 = tpu.memref_squeeze %191 : memref<1x1x!tpu.dma_semaphore, #tpu.memory_space<semaphore_mem>> -> memref<!tpu.dma_semaphore, #tpu.memory_space<semaphore_mem>>
      tpu.wait_dma2 semaphore(%192 : memref<!tpu.dma_semaphore, #tpu.memory_space<semaphore_mem>>) src(%189 : memref<1x128xf32, #tpu.memory_space<vmem>>) dst(%190 : memref<1x128xf32, #tpu.memory_space<any>>)
      %c7_i32_130 = arith.constant 7 : i32
      %c0_i32_131 = arith.constant 0 : i32
      %c0_i32_132 = arith.constant 0 : i32
      %193 = tpu.memref_slice %arg5[%c0_i32_131, %c0_i32_132] : memref<32x128xf32, #tpu.memory_space<vmem>> -> memref<1x128xf32, #tpu.memory_space<vmem>>
      %c0_i32_133 = arith.constant 0 : i32
      %c0_i32_134 = arith.constant 0 : i32
      %194 = tpu.memref_slice %arg4[%c0_i32_133, %c0_i32_134] : memref<32x128xf32, #tpu.memory_space<any>> -> memref<1x128xf32, #tpu.memory_space<any>>
      %195 = tpu.memref_slice %arg7[%2, %c7_i32_130] : memref<2x16x!tpu.dma_semaphore, #tpu.memory_space<semaphore_mem>> -> memref<1x1x!tpu.dma_semaphore, #tpu.memory_space<semaphore_mem>>
      %196 = tpu.memref_squeeze %195 : memref<1x1x!tpu.dma_semaphore, #tpu.memory_space<semaphore_mem>> -> memref<!tpu.dma_semaphore, #tpu.memory_space<semaphore_mem>>
      tpu.wait_dma2 semaphore(%196 : memref<!tpu.dma_semaphore, #tpu.memory_space<semaphore_mem>>) src(%193 : memref<1x128xf32, #tpu.memory_space<vmem>>) dst(%194 : memref<1x128xf32, #tpu.memory_space<any>>)
      %c8_i32_135 = arith.constant 8 : i32
      %c0_i32_136 = arith.constant 0 : i32
      %c0_i32_137 = arith.constant 0 : i32
      %197 = tpu.memref_slice %arg5[%c0_i32_136, %c0_i32_137] : memref<32x128xf32, #tpu.memory_space<vmem>> -> memref<1x128xf32, #tpu.memory_space<vmem>>
      %c0_i32_138 = arith.constant 0 : i32
      %c0_i32_139 = arith.constant 0 : i32
      %198 = tpu.memref_slice %arg4[%c0_i32_138, %c0_i32_139] : memref<32x128xf32, #tpu.memory_space<any>> -> memref<1x128xf32, #tpu.memory_space<any>>
      %199 = tpu.memref_slice %arg7[%2, %c8_i32_135] : memref<2x16x!tpu.dma_semaphore, #tpu.memory_space<semaphore_mem>> -> memref<1x1x!tpu.dma_semaphore, #tpu.memory_space<semaphore_mem>>
      %200 = tpu.memref_squeeze %199 : memref<1x1x!tpu.dma_semaphore, #tpu.memory_space<semaphore_mem>> -> memref<!tpu.dma_semaphore, #tpu.memory_space<semaphore_mem>>
      tpu.wait_dma2 semaphore(%200 : memref<!tpu.dma_semaphore, #tpu.memory_space<semaphore_mem>>) src(%197 : memref<1x128xf32, #tpu.memory_space<vmem>>) dst(%198 : memref<1x128xf32, #tpu.memory_space<any>>)
      %c9_i32_140 = arith.constant 9 : i32
      %c0_i32_141 = arith.constant 0 : i32
      %c0_i32_142 = arith.constant 0 : i32
      %201 = tpu.memref_slice %arg5[%c0_i32_141, %c0_i32_142] : memref<32x128xf32, #tpu.memory_space<vmem>> -> memref<1x128xf32, #tpu.memory_space<vmem>>
      %c0_i32_143 = arith.constant 0 : i32
      %c0_i32_144 = arith.constant 0 : i32
      %202 = tpu.memref_slice %arg4[%c0_i32_143, %c0_i32_144] : memref<32x128xf32, #tpu.memory_space<any>> -> memref<1x128xf32, #tpu.memory_space<any>>
      %203 = tpu.memref_slice %arg7[%2, %c9_i32_140] : memref<2x16x!tpu.dma_semaphore, #tpu.memory_space<semaphore_mem>> -> memref<1x1x!tpu.dma_semaphore, #tpu.memory_space<semaphore_mem>>
      %204 = tpu.memref_squeeze %203 : memref<1x1x!tpu.dma_semaphore, #tpu.memory_space<semaphore_mem>> -> memref<!tpu.dma_semaphore, #tpu.memory_space<semaphore_mem>>
      tpu.wait_dma2 semaphore(%204 : memref<!tpu.dma_semaphore, #tpu.memory_space<semaphore_mem>>) src(%201 : memref<1x128xf32, #tpu.memory_space<vmem>>) dst(%202 : memref<1x128xf32, #tpu.memory_space<any>>)
      %c10_i32_145 = arith.constant 10 : i32
      %c0_i32_146 = arith.constant 0 : i32
      %c0_i32_147 = arith.constant 0 : i32
      %205 = tpu.memref_slice %arg5[%c0_i32_146, %c0_i32_147] : memref<32x128xf32, #tpu.memory_space<vmem>> -> memref<1x128xf32, #tpu.memory_space<vmem>>
      %c0_i32_148 = arith.constant 0 : i32
      %c0_i32_149 = arith.constant 0 : i32
      %206 = tpu.memref_slice %arg4[%c0_i32_148, %c0_i32_149] : memref<32x128xf32, #tpu.memory_space<any>> -> memref<1x128xf32, #tpu.memory_space<any>>
      %207 = tpu.memref_slice %arg7[%2, %c10_i32_145] : memref<2x16x!tpu.dma_semaphore, #tpu.memory_space<semaphore_mem>> -> memref<1x1x!tpu.dma_semaphore, #tpu.memory_space<semaphore_mem>>
      %208 = tpu.memref_squeeze %207 : memref<1x1x!tpu.dma_semaphore, #tpu.memory_space<semaphore_mem>> -> memref<!tpu.dma_semaphore, #tpu.memory_space<semaphore_mem>>
      tpu.wait_dma2 semaphore(%208 : memref<!tpu.dma_semaphore, #tpu.memory_space<semaphore_mem>>) src(%205 : memref<1x128xf32, #tpu.memory_space<vmem>>) dst(%206 : memref<1x128xf32, #tpu.memory_space<any>>)
      %c11_i32_150 = arith.constant 11 : i32
      %c0_i32_151 = arith.constant 0 : i32
      %c0_i32_152 = arith.constant 0 : i32
      %209 = tpu.memref_slice %arg5[%c0_i32_151, %c0_i32_152] : memref<32x128xf32, #tpu.memory_space<vmem>> -> memref<1x128xf32, #tpu.memory_space<vmem>>
      %c0_i32_153 = arith.constant 0 : i32
      %c0_i32_154 = arith.constant 0 : i32
      %210 = tpu.memref_slice %arg4[%c0_i32_153, %c0_i32_154] : memref<32x128xf32, #tpu.memory_space<any>> -> memref<1x128xf32, #tpu.memory_space<any>>
      %211 = tpu.memref_slice %arg7[%2, %c11_i32_150] : memref<2x16x!tpu.dma_semaphore, #tpu.memory_space<semaphore_mem>> -> memref<1x1x!tpu.dma_semaphore, #tpu.memory_space<semaphore_mem>>
      %212 = tpu.memref_squeeze %211 : memref<1x1x!tpu.dma_semaphore, #tpu.memory_space<semaphore_mem>> -> memref<!tpu.dma_semaphore, #tpu.memory_space<semaphore_mem>>
      tpu.wait_dma2 semaphore(%212 : memref<!tpu.dma_semaphore, #tpu.memory_space<semaphore_mem>>) src(%209 : memref<1x128xf32, #tpu.memory_space<vmem>>) dst(%210 : memref<1x128xf32, #tpu.memory_space<any>>)
      %c12_i32_155 = arith.constant 12 : i32
      %c0_i32_156 = arith.constant 0 : i32
      %c0_i32_157 = arith.constant 0 : i32
      %213 = tpu.memref_slice %arg5[%c0_i32_156, %c0_i32_157] : memref<32x128xf32, #tpu.memory_space<vmem>> -> memref<1x128xf32, #tpu.memory_space<vmem>>
      %c0_i32_158 = arith.constant 0 : i32
      %c0_i32_159 = arith.constant 0 : i32
      %214 = tpu.memref_slice %arg4[%c0_i32_158, %c0_i32_159] : memref<32x128xf32, #tpu.memory_space<any>> -> memref<1x128xf32, #tpu.memory_space<any>>
      %215 = tpu.memref_slice %arg7[%2, %c12_i32_155] : memref<2x16x!tpu.dma_semaphore, #tpu.memory_space<semaphore_mem>> -> memref<1x1x!tpu.dma_semaphore, #tpu.memory_space<semaphore_mem>>
      %216 = tpu.memref_squeeze %215 : memref<1x1x!tpu.dma_semaphore, #tpu.memory_space<semaphore_mem>> -> memref<!tpu.dma_semaphore, #tpu.memory_space<semaphore_mem>>
      tpu.wait_dma2 semaphore(%216 : memref<!tpu.dma_semaphore, #tpu.memory_space<semaphore_mem>>) src(%213 : memref<1x128xf32, #tpu.memory_space<vmem>>) dst(%214 : memref<1x128xf32, #tpu.memory_space<any>>)
      %c13_i32_160 = arith.constant 13 : i32
      %c0_i32_161 = arith.constant 0 : i32
      %c0_i32_162 = arith.constant 0 : i32
      %217 = tpu.memref_slice %arg5[%c0_i32_161, %c0_i32_162] : memref<32x128xf32, #tpu.memory_space<vmem>> -> memref<1x128xf32, #tpu.memory_space<vmem>>
      %c0_i32_163 = arith.constant 0 : i32
      %c0_i32_164 = arith.constant 0 : i32
      %218 = tpu.memref_slice %arg4[%c0_i32_163, %c0_i32_164] : memref<32x128xf32, #tpu.memory_space<any>> -> memref<1x128xf32, #tpu.memory_space<any>>
      %219 = tpu.memref_slice %arg7[%2, %c13_i32_160] : memref<2x16x!tpu.dma_semaphore, #tpu.memory_space<semaphore_mem>> -> memref<1x1x!tpu.dma_semaphore, #tpu.memory_space<semaphore_mem>>
      %220 = tpu.memref_squeeze %219 : memref<1x1x!tpu.dma_semaphore, #tpu.memory_space<semaphore_mem>> -> memref<!tpu.dma_semaphore, #tpu.memory_space<semaphore_mem>>
      tpu.wait_dma2 semaphore(%220 : memref<!tpu.dma_semaphore, #tpu.memory_space<semaphore_mem>>) src(%217 : memref<1x128xf32, #tpu.memory_space<vmem>>) dst(%218 : memref<1x128xf32, #tpu.memory_space<any>>)
      %c14_i32_165 = arith.constant 14 : i32
      %c0_i32_166 = arith.constant 0 : i32
      %c0_i32_167 = arith.constant 0 : i32
      %221 = tpu.memref_slice %arg5[%c0_i32_166, %c0_i32_167] : memref<32x128xf32, #tpu.memory_space<vmem>> -> memref<1x128xf32, #tpu.memory_space<vmem>>
      %c0_i32_168 = arith.constant 0 : i32
      %c0_i32_169 = arith.constant 0 : i32
      %222 = tpu.memref_slice %arg4[%c0_i32_168, %c0_i32_169] : memref<32x128xf32, #tpu.memory_space<any>> -> memref<1x128xf32, #tpu.memory_space<any>>
      %223 = tpu.memref_slice %arg7[%2, %c14_i32_165] : memref<2x16x!tpu.dma_semaphore, #tpu.memory_space<semaphore_mem>> -> memref<1x1x!tpu.dma_semaphore, #tpu.memory_space<semaphore_mem>>
      %224 = tpu.memref_squeeze %223 : memref<1x1x!tpu.dma_semaphore, #tpu.memory_space<semaphore_mem>> -> memref<!tpu.dma_semaphore, #tpu.memory_space<semaphore_mem>>
      tpu.wait_dma2 semaphore(%224 : memref<!tpu.dma_semaphore, #tpu.memory_space<semaphore_mem>>) src(%221 : memref<1x128xf32, #tpu.memory_space<vmem>>) dst(%222 : memref<1x128xf32, #tpu.memory_space<any>>)
      %c15_i32_170 = arith.constant 15 : i32
      %c0_i32_171 = arith.constant 0 : i32
      %c0_i32_172 = arith.constant 0 : i32
      %225 = tpu.memref_slice %arg5[%c0_i32_171, %c0_i32_172] : memref<32x128xf32, #tpu.memory_space<vmem>> -> memref<1x128xf32, #tpu.memory_space<vmem>>
      %c0_i32_173 = arith.constant 0 : i32
      %c0_i32_174 = arith.constant 0 : i32
      %226 = tpu.memref_slice %arg4[%c0_i32_173, %c0_i32_174] : memref<32x128xf32, #tpu.memory_space<any>> -> memref<1x128xf32, #tpu.memory_space<any>>
      %227 = tpu.memref_slice %arg7[%2, %c15_i32_170] : memref<2x16x!tpu.dma_semaphore, #tpu.memory_space<semaphore_mem>> -> memref<1x1x!tpu.dma_semaphore, #tpu.memory_space<semaphore_mem>>
      %228 = tpu.memref_squeeze %227 : memref<1x1x!tpu.dma_semaphore, #tpu.memory_space<semaphore_mem>> -> memref<!tpu.dma_semaphore, #tpu.memory_space<semaphore_mem>>
      tpu.wait_dma2 semaphore(%228 : memref<!tpu.dma_semaphore, #tpu.memory_space<semaphore_mem>>) src(%225 : memref<1x128xf32, #tpu.memory_space<vmem>>) dst(%226 : memref<1x128xf32, #tpu.memory_space<any>>)
    } else {
    }
    return
  }
}

</mosaic_0001>

<llo_original>
// kernel: tpu_custom_call.1
$region0: #{tpu_custom_call.1}
  #allocation0 [shape = 'u32[]', space=smem, size = 0x4, offset = 0x4, fixed_abs, tag = 'smem constant byte address 0x4 - core index']
  #allocation1 [shape = 'u32[144,128]{1,0:T(1,128)}', space=vmem, size = 0x12000, scoped, tag = 'internal scratch']
  #allocation2 [shape = 'f32[32,128]{1,0:T(8,128)}', space=vmem, size = 0x4000, scoped, tag = 'scratch operand']
  #allocation3 [shape = 's32[2]{0}', space=sflag, size = 0x8, scoped, tag = 'scratch operand']
  #allocation4 [shape = 's32[32]{0}', space=sflag, size = 0x80, scoped, tag = 'scratch operand']
  #allocation5 [shape = 's32[1]{0}', space=sflag, size = 0x4, scoped, tag = 'scoped memory for tpu_custom_call.1']
  #allocation6 [shape = 'u8[512]{0}', space=smem, size = 0x200, scoped, tag = 'prefetched SMEM operand 0']
  #allocation7 [shape = 's32[]', space=sflag, size = 0x4, offset = 0, fixed_abs, tag = 'sflag constant byte address 0x0 - dummy sync flag']
  #allocation8 [shape = 's32[]', space=sflag, size = 0x4, offset = 0, fixed_abs, tag = 'sflag constant byte address 0x0 - dummy sync flag']
  #allocation9 [shape = 's32[]', space=sflag, size = 0x4, offset = 0, fixed_abs, tag = 'sflag constant byte address 0x0 - dummy sync flag']
  #allocation10 [shape = 's32[]', space=sflag, size = 0x4, offset = 0, fixed_abs, tag = 'sflag constant byte address 0x0 - dummy sync flag']
  #allocation11 [shape = 'u32[]', space=smem, size = 0x4, offset = 0x44, fixed_abs, tag = 'smem constant byte address 0x44 - assertion arg 0']
  #allocation12 [shape = 'u32[]', space=smem, size = 0x4, offset = 0x48, fixed_abs, tag = 'smem constant byte address 0x48 - assertion arg 1']
  #allocation13 [shape = 's32[]', space=sflag, size = 0x4, offset = 0, fixed_abs, tag = 'sflag constant byte address 0x0 - dummy sync flag']
  #allocation14 [shape = 's32[]', space=sflag, size = 0x4, offset = 0, fixed_abs, tag = 'sflag constant byte address 0x0 - dummy sync flag']
  #allocation15 [shape = 's32[]', space=sflag, size = 0x4, offset = 0, fixed_abs, tag = 'sflag constant byte address 0x0 - dummy sync flag']
  #allocation16 [shape = 's32[]', space=sflag, size = 0x4, offset = 0, fixed_abs, tag = 'sflag constant byte address 0x0 - dummy sync flag']
  #allocation17 [shape = 's32[]', space=sflag, size = 0x4, offset = 0, fixed_abs, tag = 'sflag constant byte address 0x0 - dummy sync flag']
  #allocation18 [shape = 's32[]', space=sflag, size = 0x4, offset = 0, fixed_abs, tag = 'sflag constant byte address 0x0 - dummy sync flag']
  #allocation19 [shape = 's32[]', space=sflag, size = 0x4, offset = 0, fixed_abs, tag = 'sflag constant byte address 0x0 - dummy sync flag']
  #allocation20 [shape = 's32[]', space=sflag, size = 0x4, offset = 0, fixed_abs, tag = 'sflag constant byte address 0x0 - dummy sync flag']
  #allocation21 [shape = 's32[]', space=sflag, size = 0x4, offset = 0, fixed_abs, tag = 'sflag constant byte address 0x0 - dummy sync flag']
  #allocation22 [shape = 's32[]', space=sflag, size = 0x4, offset = 0, fixed_abs, tag = 'sflag constant byte address 0x0 - dummy sync flag']
  #allocation23 [shape = 's32[]', space=sflag, size = 0x4, offset = 0, fixed_abs, tag = 'sflag constant byte address 0x0 - dummy sync flag']
  #allocation24 [shape = 's32[]', space=sflag, size = 0x4, offset = 0, fixed_abs, tag = 'sflag constant byte address 0x0 - dummy sync flag']
  #allocation25 [shape = 's32[]', space=sflag, size = 0x4, offset = 0, fixed_abs, tag = 'sflag constant byte address 0x0 - dummy sync flag']
  #allocation26 [shape = 's32[]', space=sflag, size = 0x4, offset = 0, fixed_abs, tag = 'sflag constant byte address 0x0 - dummy sync flag']
  #allocation27 [shape = 's32[]', space=sflag, size = 0x4, offset = 0, fixed_abs, tag = 'sflag constant byte address 0x0 - dummy sync flag']
  #allocation28 [shape = 's32[]', space=sflag, size = 0x4, offset = 0, fixed_abs, tag = 'sflag constant byte address 0x0 - dummy sync flag']
  #allocation29 [shape = 's32[]', space=sflag, size = 0x4, offset = 0, fixed_abs, tag = 'sflag constant byte address 0x0 - dummy sync flag']
  #allocation30 [shape = 's32[]', space=sflag, size = 0x4, offset = 0, fixed_abs, tag = 'sflag constant byte address 0x0 - dummy sync flag']
  #allocation31 [shape = 's32[]', space=sflag, size = 0x4, offset = 0, fixed_abs, tag = 'sflag constant byte address 0x0 - dummy sync flag']
  #allocation32 [shape = 's32[]', space=sflag, size = 0x4, offset = 0, fixed_abs, tag = 'sflag constant byte address 0x0 - dummy sync flag']
  #allocation33 [shape = 's32[]', space=sflag, size = 0x4, offset = 0, fixed_abs, tag = 'sflag constant byte address 0x0 - dummy sync flag']
  #allocation34 [shape = 's32[]', space=sflag, size = 0x4, offset = 0, fixed_abs, tag = 'sflag constant byte address 0x0 - dummy sync flag']
  #allocation35 [shape = 's32[]', space=sflag, size = 0x4, offset = 0, fixed_abs, tag = 'sflag constant byte address 0x0 - dummy sync flag']
  #allocation36 [shape = 's32[]', space=sflag, size = 0x4, offset = 0, fixed_abs, tag = 'sflag constant byte address 0x0 - dummy sync flag']
  #allocation37 [shape = 's32[]', space=sflag, size = 0x4, offset = 0, fixed_abs, tag = 'sflag constant byte address 0x0 - dummy sync flag']
  #allocation38 [shape = 's32[]', space=sflag, size = 0x4, offset = 0, fixed_abs, tag = 'sflag constant byte address 0x0 - dummy sync flag']
  #allocation39 [shape = 's32[]', space=sflag, size = 0x4, offset = 0, fixed_abs, tag = 'sflag constant byte address 0x0 - dummy sync flag']
  #allocation40 [shape = 's32[]', space=sflag, size = 0x4, offset = 0, fixed_abs, tag = 'sflag constant byte address 0x0 - dummy sync flag']
  #allocation41 [shape = 's32[]', space=sflag, size = 0x4, offset = 0, fixed_abs, tag = 'sflag constant byte address 0x0 - dummy sync flag']
  #allocation42 [shape = 's32[]', space=sflag, size = 0x4, offset = 0, fixed_abs, tag = 'sflag constant byte address 0x0 - dummy sync flag']
  %s0 = inlined_call_operand.vmem [shape: s32[32], index: 0, kind: input, shape index: {}]
  %s1 = inlined_call_operand.vmem [shape: f32[32,128], index: 1, kind: input, shape index: {}]
  %s2 = inlined_call_operand.hbm [shape: f32[32,128], index: 2, kind: input, shape index: {}, may-alias: {2,3}]
  %s3 = inlined_call_operand.hbm [shape: f32[32,128], index: 3, kind: output, shape index: {}, may-alias: {2,3}]
  %s4 = sld [smem:[#allocation0]]
  $region157: #{tpu_custom_call.1} parent=0
    _
  %s6 = ssub.s32 1, %s4
  %s7 = scalar_select 0, %s6, %s4
  %s8 = sshll.u32 %s0, 4
  %s9 = int_to_ptr.vmem [resolvable:$true] %s8
  %11 = dma.vmem_to_smem %s9, 16, [#allocation6], [#allocation5]
  %12 = dma.done [#allocation5], 16
  %13 = sfence
  loop: start=0, step=1, limit=2
  $region2: #{tpu_custom_call.1} parent=0 // loop_pre_header
    _
  $region3: #{tpu_custom_call.1} parent=0 // loop_header
    %s15 = sphi 0, %s19
    %p16 = scmp.ge.s32.totalorder %s15, 2
  $region4: #{tpu_custom_call.1} parent=0 // loop_header_branch
    %18 = sbr.rel (%p16) target = $region8
  $region5: #{tpu_custom_call.1} parent=0 // loop_body
    %s20 = sadd.s32 %s15, 1
    %s21 = smul.u32 %s15, 16
    %s22 = sand.u32 %s15, 1
    %s23 = ssub.s32 1, %s22
    %s24 = sld [smem:[#allocation6 + %s21]]
    %s25 = sadd.s32 %s21, 1
    %s26 = sld [smem:[#allocation6 + %s25]]
    %s27 = sadd.s32 %s21, 2
    %s28 = sld [smem:[#allocation6 + %s27]]
    %s29 = sadd.s32 %s21, 3
    %s30 = sld [smem:[#allocation6 + %s29]]
    %s31 = sadd.s32 %s21, 4
    %s32 = sld [smem:[#allocation6 + %s31]]
    %s33 = sadd.s32 %s21, 5
    %s34 = sld [smem:[#allocation6 + %s33]]
    %s35 = sadd.s32 %s21, 6
    %s36 = sld [smem:[#allocation6 + %s35]]
    %s37 = sadd.s32 %s21, 7
    %s38 = sld [smem:[#allocation6 + %s37]]
    %s39 = sadd.s32 %s21, 8
    %s40 = sld [smem:[#allocation6 + %s39]]
    %s41 = sadd.s32 %s21, 9
    %s42 = sld [smem:[#allocation6 + %s41]]
    %s43 = sadd.s32 %s21, 10
    %s44 = sld [smem:[#allocation6 + %s43]]
    %s45 = sadd.s32 %s21, 11
    %s46 = sld [smem:[#allocation6 + %s45]]
    %s47 = sadd.s32 %s21, 12
    %s48 = sld [smem:[#allocation6 + %s47]]
    %s49 = sadd.s32 %s21, 13
    %s50 = sld [smem:[#allocation6 + %s49]]
    %s51 = sadd.s32 %s21, 14
    %s52 = sld [smem:[#allocation6 + %s51]]
    %s53 = sadd.s32 %s21, 15
    %s54 = sld [smem:[#allocation6 + %s53]]
    %p55 = scmp.gt.s32.totalorder %s15, 0
    // Predicated region
    $region9: #{tpu_custom_call.1} parent=5 // pred_check
      %p56 = pneg %p55
    $region10: #{tpu_custom_call.1} parent=5 // pred_check_branch
      %58 = sbr.rel (%p56) target = $region12
    $region11: #{tpu_custom_call.1} parent=5 // pred_region
      %s59 = smul.u32 %s23, 16
      %s60 = scalar_lea.sflag [#allocation4], %s59
      %s61 = smul.u32 1, 1
      %s62 = sshll.u32 %s61, 4
      %63 = dma.done %s60, %s62
      %s64 = sadd.s32 1, %s59
      %s65 = scalar_lea.sflag [#allocation4], %s64
      %s66 = sshll.u32 %s61, 4
      %67 = dma.done %s65, %s66
      %s68 = sadd.s32 2, %s59
      %s69 = scalar_lea.sflag [#allocation4], %s68
      %s70 = sshll.u32 %s61, 4
      %71 = dma.done %s69, %s70
      %s72 = sadd.s32 3, %s59
      %s73 = scalar_lea.sflag [#allocation4], %s72
      %s74 = sshll.u32 %s61, 4
      %75 = dma.done %s73, %s74
      %s76 = sadd.s32 4, %s59
      %s77 = scalar_lea.sflag [#allocation4], %s76
      %s78 = sshll.u32 %s61, 4
      %79 = dma.done %s77, %s78
      %s80 = sadd.s32 5, %s59
      %s81 = scalar_lea.sflag [#allocation4], %s80
      %s82 = sshll.u32 %s61, 4
      %83 = dma.done %s81, %s82
      %s84 = sadd.s32 6, %s59
      %s85 = scalar_lea.sflag [#allocation4], %s84
      %s86 = sshll.u32 %s61, 4
      %87 = dma.done %s85, %s86
      %s88 = sadd.s32 7, %s59
      %s89 = scalar_lea.sflag [#allocation4], %s88
      %s90 = sshll.u32 %s61, 4
      %91 = dma.done %s89, %s90
      %s92 = sadd.s32 8, %s59
      %s93 = scalar_lea.sflag [#allocation4], %s92
      %s94 = sshll.u32 %s61, 4
      %95 = dma.done %s93, %s94
      %s96 = sadd.s32 9, %s59
      %s97 = scalar_lea.sflag [#allocation4], %s96
      %s98 = sshll.u32 %s61, 4
      %99 = dma.done %s97, %s98
      %s100 = sadd.s32 10, %s59
      %s101 = scalar_lea.sflag [#allocation4], %s100
      %s102 = sshll.u32 %s61, 4
      %103 = dma.done %s101, %s102
      %s104 = sadd.s32 11, %s59
      %s105 = scalar_lea.sflag [#allocation4], %s104
      %s106 = sshll.u32 %s61, 4
      %107 = dma.done %s105, %s106
      %s108 = sadd.s32 12, %s59
      %s109 = scalar_lea.sflag [#allocation4], %s108
      %s110 = sshll.u32 %s61, 4
      %111 = dma.done %s109, %s110
      %s112 = sadd.s32 13, %s59
      %s113 = scalar_lea.sflag [#allocation4], %s112
      %s114 = sshll.u32 %s61, 4
      %115 = dma.done %s113, %s114
      %s116 = sadd.s32 14, %s59
      %s117 = scalar_lea.sflag [#allocation4], %s116
      %s118 = sshll.u32 %s61, 4
      %119 = dma.done %s117, %s118
      %s120 = sadd.s32 15, %s59
      %s121 = scalar_lea.sflag [#allocation4], %s120
      %s122 = sshll.u32 %s61, 4
      %123 = dma.done %s121, %s122
    $region12: #{tpu_custom_call.1} parent=5 // pred_fallthru
      _
    %p124 = scmp.eq.s32.totalorder %s15, 0
    // Predicated region
    $region13: #{tpu_custom_call.1} parent=5 // pred_check
      %p125 = pneg %p124
    $region14: #{tpu_custom_call.1} parent=5 // pred_check_branch
      %127 = sbr.rel (%p125) target = $region16
    $region15: #{tpu_custom_call.1} parent=5 // pred_region
      %p129 = scmp.lt.u32.totalorder 16, 8
      %p130 = pneg %p129
      // Predicated region
      $region17: #{tpu_custom_call.1} parent=15 // pred_check
        _
      $region18: #{tpu_custom_call.1} parent=15 // pred_check_branch
        %132 = sbr.rel (%p129) target = $region20
      $region19: #{tpu_custom_call.1} parent=15 // pred_region
        %s148 = sand.u32 16, 7
        %p149 = scmp.eq.s32.totalorder %s148, 0
        // Predicated region
        $region32: #{tpu_custom_call.1} parent=19 // pred_check
          %p150 = pneg %p149
        $region33: #{tpu_custom_call.1} parent=19 // pred_check_branch
          %152 = sbr.rel (%p150) target = $region35
        $region34: #{tpu_custom_call.1} parent=19 // pred_region
          loop: start=0, step=1, limit=1
          $region36: #{tpu_custom_call.1} parent=34 // loop_pre_header
            _
          $region37: #{tpu_custom_call.1} parent=34 // loop_header
            %s154 = sphi 0, %s158
            %p155 = scmp.ge.s32.totalorder %s154, 1
            %s159 = sphi %s1, %s1
            %s160 = sphi [#allocation2], [#allocation2]
          $region38: #{tpu_custom_call.1} parent=34 // loop_header_branch
            %157 = sbr.rel (%p155) target = $region42
          $region39: #{tpu_custom_call.1} parent=34 // loop_body
            %v161 = vld [vmem:[%s159] sm:$0xff]
            %162 = vst [vmem:[%s160] sm:$0xff] %v161
            %v163 = vld [vmem:[%s159 + $0x8] sm:$0xff]
            %164 = vst [vmem:[%s160 + $0x8] sm:$0xff] %v163
          $region40: #{tpu_custom_call.1} parent=34 // loop_footer
            %s158 = sadd.s32 1, %s154
          $region41: #{tpu_custom_call.1} parent=34 // loop_footer_branch
            %153 = sbr.rel target = $region37
          $region42: #{tpu_custom_call.1} parent=34 // loop_exit
            _
        $region35: #{tpu_custom_call.1} parent=19 // pred_fallthru
          _
        %p165 = pneg %p149
        // Predicated region
        $region43: #{tpu_custom_call.1} parent=19 // pred_check
          _
        $region44: #{tpu_custom_call.1} parent=19 // pred_check_branch
          %167 = sbr.rel (%p149) target = $region46
        $region45: #{tpu_custom_call.1} parent=19 // pred_region
          %s168 = sand.u32 16, 7
        $region46: #{tpu_custom_call.1} parent=19 // pred_fallthru
          _
      $region20: #{tpu_custom_call.1} parent=15 // pred_fallthru
        _
      // Predicated region
      $region21: #{tpu_custom_call.1} parent=15 // pred_check
        %p133 = pneg %p129
      $region22: #{tpu_custom_call.1} parent=15 // pred_check_branch
        %135 = sbr.rel (%p133) target = $region24
      $region23: #{tpu_custom_call.1} parent=15 // pred_region
        %s136 = sshll.u32 1, 16
        %s137 = ssub.s32 %s136, 1
        loop: start=0, step=1, limit=1
        $region25: #{tpu_custom_call.1} parent=23 // loop_pre_header
          _
        $region26: #{tpu_custom_call.1} parent=23 // loop_header
          %s139 = sphi 0, %s143
          %p140 = scmp.ge.s32.totalorder %s139, 1
          %s144 = sphi %s1, %s1
          %s145 = sphi [#allocation2], [#allocation2]
        $region27: #{tpu_custom_call.1} parent=23 // loop_header_branch
          %142 = sbr.rel (%p140) target = $region31
        $region28: #{tpu_custom_call.1} parent=23 // loop_body
          %v146 = vld [vmem:[%s144] sm:%s137]
          %147 = vst [vmem:[%s145] sm:%s137] %v146
        $region29: #{tpu_custom_call.1} parent=23 // loop_footer
          %s143 = sadd.s32 1, %s139
        $region30: #{tpu_custom_call.1} parent=23 // loop_footer_branch
          %138 = sbr.rel target = $region26
        $region31: #{tpu_custom_call.1} parent=23 // loop_exit
          _
      $region24: #{tpu_custom_call.1} parent=15 // pred_fallthru
        _
      // Predicated region
      $region47: #{tpu_custom_call.1} parent=15 // pred_check
        _
      $region48: #{tpu_custom_call.1} parent=15 // pred_check_branch
        %171 = sbr.rel (0) target = $region50
      $region49: #{tpu_custom_call.1} parent=15 // pred_region
        %172 = vsyncadd [#allocation3], 256
      $region50: #{tpu_custom_call.1} parent=15 // pred_fallthru
        _
    $region16: #{tpu_custom_call.1} parent=5 // pred_fallthru
      _
    %s173 = sadd.s32 %s15, 1
    %p174 = scmp.lt.s32.totalorder %s173, 2
    // Predicated region
    $region51: #{tpu_custom_call.1} parent=5 // pred_check
      %p175 = pneg %p174
    $region52: #{tpu_custom_call.1} parent=5 // pred_check_branch
      %177 = sbr.rel (%p175) target = $region54
    $region53: #{tpu_custom_call.1} parent=5 // pred_region
      %s178 = smul.u32 %s173, 16
      %s179 = smul.u32 %s23, 16
      %s180 = scalar_lea.vmem %s1, %s178
      %s181 = scalar_lea.vmem [#allocation2], %s179
      %s182 = scalar_lea.sflag [#allocation3], %s23
      %p184 = scmp.lt.u32.totalorder 16, 8
      %p185 = pneg %p184
      // Predicated region
      $region55: #{tpu_custom_call.1} parent=53 // pred_check
        _
      $region56: #{tpu_custom_call.1} parent=53 // pred_check_branch
        %187 = sbr.rel (%p184) target = $region58
      $region57: #{tpu_custom_call.1} parent=53 // pred_region
        %s203 = sand.u32 16, 7
        %p204 = scmp.eq.s32.totalorder %s203, 0
        // Predicated region
        $region70: #{tpu_custom_call.1} parent=57 // pred_check
          %p205 = pneg %p204
        $region71: #{tpu_custom_call.1} parent=57 // pred_check_branch
          %207 = sbr.rel (%p205) target = $region73
        $region72: #{tpu_custom_call.1} parent=57 // pred_region
          loop: start=0, step=1, limit=1
          $region74: #{tpu_custom_call.1} parent=72 // loop_pre_header
            _
          $region75: #{tpu_custom_call.1} parent=72 // loop_header
            %s209 = sphi 0, %s213
            %p210 = scmp.ge.s32.totalorder %s209, 1
            %s214 = sphi %s180, %s180
            %s215 = sphi %s181, %s181
          $region76: #{tpu_custom_call.1} parent=72 // loop_header_branch
            %212 = sbr.rel (%p210) target = $region80
          $region77: #{tpu_custom_call.1} parent=72 // loop_body
            %v216 = vld [vmem:[%s214] sm:$0xff]
            %217 = vst [vmem:[%s215] sm:$0xff] %v216
            %v218 = vld [vmem:[%s214 + $0x8] sm:$0xff]
            %219 = vst [vmem:[%s215 + $0x8] sm:$0xff] %v218
          $region78: #{tpu_custom_call.1} parent=72 // loop_footer
            %s213 = sadd.s32 1, %s209
          $region79: #{tpu_custom_call.1} parent=72 // loop_footer_branch
            %208 = sbr.rel target = $region75
          $region80: #{tpu_custom_call.1} parent=72 // loop_exit
            _
        $region73: #{tpu_custom_call.1} parent=57 // pred_fallthru
          _
        %p220 = pneg %p204
        // Predicated region
        $region81: #{tpu_custom_call.1} parent=57 // pred_check
          _
        $region82: #{tpu_custom_call.1} parent=57 // pred_check_branch
          %222 = sbr.rel (%p204) target = $region84
        $region83: #{tpu_custom_call.1} parent=57 // pred_region
          %s223 = sand.u32 16, 7
        $region84: #{tpu_custom_call.1} parent=57 // pred_fallthru
          _
      $region58: #{tpu_custom_call.1} parent=53 // pred_fallthru
        _
      // Predicated region
      $region59: #{tpu_custom_call.1} parent=53 // pred_check
        %p188 = pneg %p184
      $region60: #{tpu_custom_call.1} parent=53 // pred_check_branch
        %190 = sbr.rel (%p188) target = $region62
      $region61: #{tpu_custom_call.1} parent=53 // pred_region
        %s191 = sshll.u32 1, 16
        %s192 = ssub.s32 %s191, 1
        loop: start=0, step=1, limit=1
        $region63: #{tpu_custom_call.1} parent=61 // loop_pre_header
          _
        $region64: #{tpu_custom_call.1} parent=61 // loop_header
          %s194 = sphi 0, %s198
          %p195 = scmp.ge.s32.totalorder %s194, 1
          %s199 = sphi %s180, %s180
          %s200 = sphi %s181, %s181
        $region65: #{tpu_custom_call.1} parent=61 // loop_header_branch
          %197 = sbr.rel (%p195) target = $region69
        $region66: #{tpu_custom_call.1} parent=61 // loop_body
          %v201 = vld [vmem:[%s199] sm:%s192]
          %202 = vst [vmem:[%s200] sm:%s192] %v201
        $region67: #{tpu_custom_call.1} parent=61 // loop_footer
          %s198 = sadd.s32 1, %s194
        $region68: #{tpu_custom_call.1} parent=61 // loop_footer_branch
          %193 = sbr.rel target = $region64
        $region69: #{tpu_custom_call.1} parent=61 // loop_exit
          _
      $region62: #{tpu_custom_call.1} parent=53 // pred_fallthru
        _
      // Predicated region
      $region85: #{tpu_custom_call.1} parent=53 // pred_check
        _
      $region86: #{tpu_custom_call.1} parent=53 // pred_check_branch
        %226 = sbr.rel (0) target = $region88
      $region87: #{tpu_custom_call.1} parent=53 // pred_region
        %227 = vsyncadd %s182, 256
      $region88: #{tpu_custom_call.1} parent=53 // pred_fallthru
        _
    $region54: #{tpu_custom_call.1} parent=5 // pred_fallthru
      _
    %s228 = scalar_lea.sflag [#allocation3], %s22
    %s229 = smul.u32 16, 1
    %s230 = sshll.u32 %s229, 4
    %231 = dma.done %s228, %s230
    %s232 = smul.u32 %s22, 16
    %s233 = scalar_lea.vmem [#allocation2], %s232
    %s234 = smul.addr %s24, 16
    %s235 = scalar_lea.hbm %s3, %s234
    %s236 = scalar_lea.sflag [#allocation4], %s232
    // Predicated region
    $region89: #{tpu_custom_call.1} parent=5 // pred_check
      _
    $region90: #{tpu_custom_call.1} parent=5 // pred_check_branch
      %238 = sbr.rel target = $region92
    $region91: #{tpu_custom_call.1} parent=5 // pred_region
      %239 = sst [smem:[#allocation11]] [#allocation10]
      %240 = sst [smem:[#allocation12]] [#allocation9]
    $region92: #{tpu_custom_call.1} parent=5 // pred_fallthru
      _
    %242 = shalt.err (0)
    %s244 = sshll.u32 %s233, 4
    %s245 = int_to_ptr.vmem [resolvable:$true] %s244
    %247 = dma.vmem_to_hbm [thread:$0]  %s245, 16, %s235, %s236
    %s248 = sadd.s32 %s232, 1
    %s249 = scalar_lea.vmem [#allocation2], %s248
    %s250 = smul.addr %s26, 16
    %s251 = scalar_lea.hbm %s3, %s250
    %s252 = sadd.s32 1, %s232
    %s253 = scalar_lea.sflag [#allocation4], %s252
    // Predicated region
    $region93: #{tpu_custom_call.1} parent=5 // pred_check
      _
    $region94: #{tpu_custom_call.1} parent=5 // pred_check_branch
      %255 = sbr.rel target = $region96
    $region95: #{tpu_custom_call.1} parent=5 // pred_region
      %256 = sst [smem:[#allocation11]] [#allocation14]
      %257 = sst [smem:[#allocation12]] [#allocation13]
    $region96: #{tpu_custom_call.1} parent=5 // pred_fallthru
      _
    %259 = shalt.err (0)
    %s261 = sshll.u32 %s249, 4
    %s262 = int_to_ptr.vmem [resolvable:$true] %s261
    %264 = dma.vmem_to_hbm [thread:$0]  %s262, 16, %s251, %s253
    %s265 = sadd.s32 %s232, 2
    %s266 = scalar_lea.vmem [#allocation2], %s265
    %s267 = smul.addr %s28, 16
    %s268 = scalar_lea.hbm %s3, %s267
    %s269 = sadd.s32 2, %s232
    %s270 = scalar_lea.sflag [#allocation4], %s269
    // Predicated region
    $region97: #{tpu_custom_call.1} parent=5 // pred_check
      _
    $region98: #{tpu_custom_call.1} parent=5 // pred_check_branch
      %272 = sbr.rel target = $region100
    $region99: #{tpu_custom_call.1} parent=5 // pred_region
      %273 = sst [smem:[#allocation11]] [#allocation16]
      %274 = sst [smem:[#allocation12]] [#allocation15]
    $region100: #{tpu_custom_call.1} parent=5 // pred_fallthru
      _
    %276 = shalt.err (0)
    %s278 = sshll.u32 %s266, 4
    %s279 = int_to_ptr.vmem [resolvable:$true] %s278
    %281 = dma.vmem_to_hbm [thread:$0]  %s279, 16, %s268, %s270
    %s282 = sadd.s32 %s232, 3
    %s283 = scalar_lea.vmem [#allocation2], %s282
    %s284 = smul.addr %s30, 16
    %s285 = scalar_lea.hbm %s3, %s284
    %s286 = sadd.s32 3, %s232
    %s287 = scalar_lea.sflag [#allocation4], %s286
    // Predicated region
    $region101: #{tpu_custom_call.1} parent=5 // pred_check
      _
    $region102: #{tpu_custom_call.1} parent=5 // pred_check_branch
      %289 = sbr.rel target = $region104
    $region103: #{tpu_custom_call.1} parent=5 // pred_region
      %290 = sst [smem:[#allocation11]] [#allocation18]
      %291 = sst [smem:[#allocation12]] [#allocation17]
    $region104: #{tpu_custom_call.1} parent=5 // pred_fallthru
      _
    %293 = shalt.err (0)
    %s295 = sshll.u32 %s283, 4
    %s296 = int_to_ptr.vmem [resolvable:$true] %s295
    %298 = dma.vmem_to_hbm [thread:$0]  %s296, 16, %s285, %s287
    %s299 = sadd.s32 %s232, 4
    %s300 = scalar_lea.vmem [#allocation2], %s299
    %s301 = smul.addr %s32, 16
    %s302 = scalar_lea.hbm %s3, %s301
    %s303 = sadd.s32 4, %s232
    %s304 = scalar_lea.sflag [#allocation4], %s303
    // Predicated region
    $region105: #{tpu_custom_call.1} parent=5 // pred_check
      _
    $region106: #{tpu_custom_call.1} parent=5 // pred_check_branch
      %306 = sbr.rel target = $region108
    $region107: #{tpu_custom_call.1} parent=5 // pred_region
      %307 = sst [smem:[#allocation11]] [#allocation20]
      %308 = sst [smem:[#allocation12]] [#allocation19]
    $region108: #{tpu_custom_call.1} parent=5 // pred_fallthru
      _
    %310 = shalt.err (0)
    %s312 = sshll.u32 %s300, 4
    %s313 = int_to_ptr.vmem [resolvable:$true] %s312
    %315 = dma.vmem_to_hbm [thread:$0]  %s313, 16, %s302, %s304
    %s316 = sadd.s32 %s232, 5
    %s317 = scalar_lea.vmem [#allocation2], %s316
    %s318 = smul.addr %s34, 16
    %s319 = scalar_lea.hbm %s3, %s318
    %s320 = sadd.s32 5, %s232
    %s321 = scalar_lea.sflag [#allocation4], %s320
    // Predicated region
    $region109: #{tpu_custom_call.1} parent=5 // pred_check
      _
    $region110: #{tpu_custom_call.1} parent=5 // pred_check_branch
      %323 = sbr.rel target = $region112
    $region111: #{tpu_custom_call.1} parent=5 // pred_region
      %324 = sst [smem:[#allocation11]] [#allocation22]
      %325 = sst [smem:[#allocation12]] [#allocation21]
    $region112: #{tpu_custom_call.1} parent=5 // pred_fallthru
      _
    %327 = shalt.err (0)
    %s329 = sshll.u32 %s317, 4
    %s330 = int_to_ptr.vmem [resolvable:$true] %s329
    %332 = dma.vmem_to_hbm [thread:$0]  %s330, 16, %s319, %s321
    %s333 = sadd.s32 %s232, 6
    %s334 = scalar_lea.vmem [#allocation2], %s333
    %s335 = smul.addr %s36, 16
    %s336 = scalar_lea.hbm %s3, %s335
    %s337 = sadd.s32 6, %s232
    %s338 = scalar_lea.sflag [#allocation4], %s337
    // Predicated region
    $region113: #{tpu_custom_call.1} parent=5 // pred_check
      _
    $region114: #{tpu_custom_call.1} parent=5 // pred_check_branch
      %340 = sbr.rel target = $region116
    $region115: #{tpu_custom_call.1} parent=5 // pred_region
      %341 = sst [smem:[#allocation11]] [#allocation24]
      %342 = sst [smem:[#allocation12]] [#allocation23]
    $region116: #{tpu_custom_call.1} parent=5 // pred_fallthru
      _
    %344 = shalt.err (0)
    %s346 = sshll.u32 %s334, 4
    %s347 = int_to_ptr.vmem [resolvable:$true] %s346
    %349 = dma.vmem_to_hbm [thread:$0]  %s347, 16, %s336, %s338
    %s350 = sadd.s32 %s232, 7
    %s351 = scalar_lea.vmem [#allocation2], %s350
    %s352 = smul.addr %s38, 16
    %s353 = scalar_lea.hbm %s3, %s352
    %s354 = sadd.s32 7, %s232
    %s355 = scalar_lea.sflag [#allocation4], %s354
    // Predicated region
    $region117: #{tpu_custom_call.1} parent=5 // pred_check
      _
    $region118: #{tpu_custom_call.1} parent=5 // pred_check_branch
      %357 = sbr.rel target = $region120
    $region119: #{tpu_custom_call.1} parent=5 // pred_region
      %358 = sst [smem:[#allocation11]] [#allocation26]
      %359 = sst [smem:[#allocation12]] [#allocation25]
    $region120: #{tpu_custom_call.1} parent=5 // pred_fallthru
      _
    %361 = shalt.err (0)
    %s363 = sshll.u32 %s351, 4
    %s364 = int_to_ptr.vmem [resolvable:$true] %s363
    %366 = dma.vmem_to_hbm [thread:$0]  %s364, 16, %s353, %s355
    %s367 = sadd.s32 %s232, 8
    %s368 = scalar_lea.vmem [#allocation2], %s367
    %s369 = smul.addr %s40, 16
    %s370 = scalar_lea.hbm %s3, %s369
    %s371 = sadd.s32 8, %s232
    %s372 = scalar_lea.sflag [#allocation4], %s371
    // Predicated region
    $region121: #{tpu_custom_call.1} parent=5 // pred_check
      _
    $region122: #{tpu_custom_call.1} parent=5 // pred_check_branch
      %374 = sbr.rel target = $region124
    $region123: #{tpu_custom_call.1} parent=5 // pred_region
      %375 = sst [smem:[#allocation11]] [#allocation28]
      %376 = sst [smem:[#allocation12]] [#allocation27]
    $region124: #{tpu_custom_call.1} parent=5 // pred_fallthru
      _
    %378 = shalt.err (0)
    %s380 = sshll.u32 %s368, 4
    %s381 = int_to_ptr.vmem [resolvable:$true] %s380
    %383 = dma.vmem_to_hbm [thread:$0]  %s381, 16, %s370, %s372
    %s384 = sadd.s32 %s232, 9
    %s385 = scalar_lea.vmem [#allocation2], %s384
    %s386 = smul.addr %s42, 16
    %s387 = scalar_lea.hbm %s3, %s386
    %s388 = sadd.s32 9, %s232
    %s389 = scalar_lea.sflag [#allocation4], %s388
    // Predicated region
    $region125: #{tpu_custom_call.1} parent=5 // pred_check
      _
    $region126: #{tpu_custom_call.1} parent=5 // pred_check_branch
      %391 = sbr.rel target = $region128
    $region127: #{tpu_custom_call.1} parent=5 // pred_region
      %392 = sst [smem:[#allocation11]] [#allocation30]
      %393 = sst [smem:[#allocation12]] [#allocation29]
    $region128: #{tpu_custom_call.1} parent=5 // pred_fallthru
      _
    %395 = shalt.err (0)
    %s397 = sshll.u32 %s385, 4
    %s398 = int_to_ptr.vmem [resolvable:$true] %s397
    %400 = dma.vmem_to_hbm [thread:$0]  %s398, 16, %s387, %s389
    %s401 = sadd.s32 %s232, 10
    %s402 = scalar_lea.vmem [#allocation2], %s401
    %s403 = smul.addr %s44, 16
    %s404 = scalar_lea.hbm %s3, %s403
    %s405 = sadd.s32 10, %s232
    %s406 = scalar_lea.sflag [#allocation4], %s405
    // Predicated region
    $region129: #{tpu_custom_call.1} parent=5 // pred_check
      _
    $region130: #{tpu_custom_call.1} parent=5 // pred_check_branch
      %408 = sbr.rel target = $region132
    $region131: #{tpu_custom_call.1} parent=5 // pred_region
      %409 = sst [smem:[#allocation11]] [#allocation32]
      %410 = sst [smem:[#allocation12]] [#allocation31]
    $region132: #{tpu_custom_call.1} parent=5 // pred_fallthru
      _
    %412 = shalt.err (0)
    %s414 = sshll.u32 %s402, 4
    %s415 = int_to_ptr.vmem [resolvable:$true] %s414
    %417 = dma.vmem_to_hbm [thread:$0]  %s415, 16, %s404, %s406
    %s418 = sadd.s32 %s232, 11
    %s419 = scalar_lea.vmem [#allocation2], %s418
    %s420 = smul.addr %s46, 16
    %s421 = scalar_lea.hbm %s3, %s420
    %s422 = sadd.s32 11, %s232
    %s423 = scalar_lea.sflag [#allocation4], %s422
    // Predicated region
    $region133: #{tpu_custom_call.1} parent=5 // pred_check
      _
    $region134: #{tpu_custom_call.1} parent=5 // pred_check_branch
      %425 = sbr.rel target = $region136
    $region135: #{tpu_custom_call.1} parent=5 // pred_region
      %426 = sst [smem:[#allocation11]] [#allocation34]
      %427 = sst [smem:[#allocation12]] [#allocation33]
    $region136: #{tpu_custom_call.1} parent=5 // pred_fallthru
      _
    %429 = shalt.err (0)
    %s431 = sshll.u32 %s419, 4
    %s432 = int_to_ptr.vmem [resolvable:$true] %s431
    %434 = dma.vmem_to_hbm [thread:$0]  %s432, 16, %s421, %s423
    %s435 = sadd.s32 %s232, 12
    %s436 = scalar_lea.vmem [#allocation2], %s435
    %s437 = smul.addr %s48, 16
    %s438 = scalar_lea.hbm %s3, %s437
    %s439 = sadd.s32 12, %s232
    %s440 = scalar_lea.sflag [#allocation4], %s439
    // Predicated region
    $region137: #{tpu_custom_call.1} parent=5 // pred_check
      _
    $region138: #{tpu_custom_call.1} parent=5 // pred_check_branch
      %442 = sbr.rel target = $region140
    $region139: #{tpu_custom_call.1} parent=5 // pred_region
      %443 = sst [smem:[#allocation11]] [#allocation36]
      %444 = sst [smem:[#allocation12]] [#allocation35]
    $region140: #{tpu_custom_call.1} parent=5 // pred_fallthru
      _
    %446 = shalt.err (0)
    %s448 = sshll.u32 %s436, 4
    %s449 = int_to_ptr.vmem [resolvable:$true] %s448
    %451 = dma.vmem_to_hbm [thread:$0]  %s449, 16, %s438, %s440
    %s452 = sadd.s32 %s232, 13
    %s453 = scalar_lea.vmem [#allocation2], %s452
    %s454 = smul.addr %s50, 16
    %s455 = scalar_lea.hbm %s3, %s454
    %s456 = sadd.s32 13, %s232
    %s457 = scalar_lea.sflag [#allocation4], %s456
    // Predicated region
    $region141: #{tpu_custom_call.1} parent=5 // pred_check
      _
    $region142: #{tpu_custom_call.1} parent=5 // pred_check_branch
      %459 = sbr.rel target = $region144
    $region143: #{tpu_custom_call.1} parent=5 // pred_region
      %460 = sst [smem:[#allocation11]] [#allocation38]
      %461 = sst [smem:[#allocation12]] [#allocation37]
    $region144: #{tpu_custom_call.1} parent=5 // pred_fallthru
      _
    %463 = shalt.err (0)
    %s465 = sshll.u32 %s453, 4
    %s466 = int_to_ptr.vmem [resolvable:$true] %s465
    %468 = dma.vmem_to_hbm [thread:$0]  %s466, 16, %s455, %s457
    %s469 = sadd.s32 %s232, 14
    %s470 = scalar_lea.vmem [#allocation2], %s469
    %s471 = smul.addr %s52, 16
    %s472 = scalar_lea.hbm %s3, %s471
    %s473 = sadd.s32 14, %s232
    %s474 = scalar_lea.sflag [#allocation4], %s473
    // Predicated region
    $region145: #{tpu_custom_call.1} parent=5 // pred_check
      _
    $region146: #{tpu_custom_call.1} parent=5 // pred_check_branch
      %476 = sbr.rel target = $region148
    $region147: #{tpu_custom_call.1} parent=5 // pred_region
      %477 = sst [smem:[#allocation11]] [#allocation40]
      %478 = sst [smem:[#allocation12]] [#allocation39]
    $region148: #{tpu_custom_call.1} parent=5 // pred_fallthru
      _
    %480 = shalt.err (0)
    %s482 = sshll.u32 %s470, 4
    %s483 = int_to_ptr.vmem [resolvable:$true] %s482
    %485 = dma.vmem_to_hbm [thread:$0]  %s483, 16, %s472, %s474
    %s486 = sadd.s32 %s232, 15
    %s487 = scalar_lea.vmem [#allocation2], %s486
    %s488 = smul.addr %s54, 16
    %s489 = scalar_lea.hbm %s3, %s488
    %s490 = sadd.s32 15, %s232
    %s491 = scalar_lea.sflag [#allocation4], %s490
    // Predicated region
    $region149: #{tpu_custom_call.1} parent=5 // pred_check
      _
    $region150: #{tpu_custom_call.1} parent=5 // pred_check_branch
      %493 = sbr.rel target = $region152
    $region151: #{tpu_custom_call.1} parent=5 // pred_region
      %494 = sst [smem:[#allocation11]] [#allocation42]
      %495 = sst [smem:[#allocation12]] [#allocation41]
    $region152: #{tpu_custom_call.1} parent=5 // pred_fallthru
      _
    %497 = shalt.err (0)
    %s499 = sshll.u32 %s487, 4
    %s500 = int_to_ptr.vmem [resolvable:$true] %s499
    %502 = dma.vmem_to_hbm [thread:$0]  %s500, 16, %s489, %s491
    %p503 = scmp.eq.s32.totalorder %s15, 1
    // Predicated region
    $region153: #{tpu_custom_call.1} parent=5 // pred_check
      %p504 = pneg %p503
    $region154: #{tpu_custom_call.1} parent=5 // pred_check_branch
      %506 = sbr.rel (%p504) target = $region156
    $region155: #{tpu_custom_call.1} parent=5 // pred_region
      %s507 = smul.u32 1, 1
      %s508 = sshll.u32 %s507, 4
      %509 = dma.done %s236, %s508
      %s510 = sshll.u32 %s507, 4
      %511 = dma.done %s253, %s510
      %s512 = sshll.u32 %s507, 4
      %513 = dma.done %s270, %s512
      %s514 = sshll.u32 %s507, 4
      %515 = dma.done %s287, %s514
      %s516 = sshll.u32 %s507, 4
      %517 = dma.done %s304, %s516
      %s518 = sshll.u32 %s507, 4
      %519 = dma.done %s321, %s518
      %s520 = sshll.u32 %s507, 4
      %521 = dma.done %s338, %s520
      %s522 = sshll.u32 %s507, 4
      %523 = dma.done %s355, %s522
      %s524 = sshll.u32 %s507, 4
      %525 = dma.done %s372, %s524
      %s526 = sshll.u32 %s507, 4
      %527 = dma.done %s389, %s526
      %s528 = sshll.u32 %s507, 4
      %529 = dma.done %s406, %s528
      %s530 = sshll.u32 %s507, 4
      %531 = dma.done %s423, %s530
      %s532 = sshll.u32 %s507, 4
      %533 = dma.done %s440, %s532
      %s534 = sshll.u32 %s507, 4
      %535 = dma.done %s457, %s534
      %s536 = sshll.u32 %s507, 4
      %537 = dma.done %s474, %s536
      %s538 = sshll.u32 %s507, 4
      %539 = dma.done %s491, %s538
    $region156: #{tpu_custom_call.1} parent=5 // pred_fallthru
      _
  $region6: #{tpu_custom_call.1} parent=0 // loop_footer
    %s19 = sadd.s32 1, %s15
  $region7: #{tpu_custom_call.1} parent=0 // loop_footer_branch
    %14 = sbr.rel target = $region3
  $region8: #{tpu_custom_call.1} parent=0 // loop_exit
    _
  %540 = vsyncmov [#allocation3]
  %s541 = vpop.sfrf %540
  %p542 = scmp.eq.s32.totalorder %s541, 0
  %p543 = pneg %p542
  %545 = shalt.err (%p543)
  %s546 = scalar_lea.sflag [#allocation3], 1
  %547 = vsyncmov %s546
  %s548 = vpop.sfrf %547
  %p549 = scmp.eq.s32.totalorder %s548, 0
  %p550 = pneg %p549
  %552 = shalt.err (%p550)
  %553 = vsyncmov [#allocation4]
  %s554 = vpop.sfrf %553
  %p555 = scmp.eq.s32.totalorder %s554, 0
  %p556 = pneg %p555
  %558 = shalt.err (%p556)
  %s559 = scalar_lea.sflag [#allocation4], 1
  %560 = vsyncmov %s559
  %s561 = vpop.sfrf %560
  %p562 = scmp.eq.s32.totalorder %s561, 0
  %p563 = pneg %p562
  %565 = shalt.err (%p563)
  %s566 = scalar_lea.sflag [#allocation4], 2
  %567 = vsyncmov %s566
  %s568 = vpop.sfrf %567
  %p569 = scmp.eq.s32.totalorder %s568, 0
  %p570 = pneg %p569
  %572 = shalt.err (%p570)
  %s573 = scalar_lea.sflag [#allocation4], 3
  %574 = vsyncmov %s573
  %s575 = vpop.sfrf %574
  %p576 = scmp.eq.s32.totalorder %s575, 0
  %p577 = pneg %p576
  %579 = shalt.err (%p577)
  %s580 = scalar_lea.sflag [#allocation4], 4
  %581 = vsyncmov %s580
  %s582 = vpop.sfrf %581
  %p583 = scmp.eq.s32.totalorder %s582, 0
  %p584 = pneg %p583
  %586 = shalt.err (%p584)
  %s587 = scalar_lea.sflag [#allocation4], 5
  %588 = vsyncmov %s587
  %s589 = vpop.sfrf %588
  %p590 = scmp.eq.s32.totalorder %s589, 0
  %p591 = pneg %p590
  %593 = shalt.err (%p591)
  %s594 = scalar_lea.sflag [#allocation4], 6
  %595 = vsyncmov %s594
  %s596 = vpop.sfrf %595
  %p597 = scmp.eq.s32.totalorder %s596, 0
  %p598 = pneg %p597
  %600 = shalt.err (%p598)
  %s601 = scalar_lea.sflag [#allocation4], 7
  %602 = vsyncmov %s601
  %s603 = vpop.sfrf %602
  %p604 = scmp.eq.s32.totalorder %s603, 0
  %p605 = pneg %p604
  %607 = shalt.err (%p605)
  %s608 = scalar_lea.sflag [#allocation4], 8
  %609 = vsyncmov %s608
  %s610 = vpop.sfrf %609
  %p611 = scmp.eq.s32.totalorder %s610, 0
  %p612 = pneg %p611
  %614 = shalt.err (%p612)
  %s615 = scalar_lea.sflag [#allocation4], 9
  %616 = vsyncmov %s615
  %s617 = vpop.sfrf %616
  %p618 = scmp.eq.s32.totalorder %s617, 0
  %p619 = pneg %p618
  %621 = shalt.err (%p619)
  %s622 = scalar_lea.sflag [#allocation4], 10
  %623 = vsyncmov %s622
  %s624 = vpop.sfrf %623
  %p625 = scmp.eq.s32.totalorder %s624, 0
  %p626 = pneg %p625
  %628 = shalt.err (%p626)
  %s629 = scalar_lea.sflag [#allocation4], 11
  %630 = vsyncmov %s629
  %s631 = vpop.sfrf %630
  %p632 = scmp.eq.s32.totalorder %s631, 0
  %p633 = pneg %p632
  %635 = shalt.err (%p633)
  %s636 = scalar_lea.sflag [#allocation4], 12
  %637 = vsyncmov %s636
  %s638 = vpop.sfrf %637
  %p639 = scmp.eq.s32.totalorder %s638, 0
  %p640 = pneg %p639
  %642 = shalt.err (%p640)
  %s643 = scalar_lea.sflag [#allocation4], 13
  %644 = vsyncmov %s643
  %s645 = vpop.sfrf %644
  %p646 = scmp.eq.s32.totalorder %s645, 0
  %p647 = pneg %p646
  %649 = shalt.err (%p647)
  %s650 = scalar_lea.sflag [#allocation4], 14
  %651 = vsyncmov %s650
  %s652 = vpop.sfrf %651
  %p653 = scmp.eq.s32.totalorder %s652, 0
  %p654 = pneg %p653
  %656 = shalt.err (%p654)
  %s657 = scalar_lea.sflag [#allocation4], 15
  %658 = vsyncmov %s657
  %s659 = vpop.sfrf %658
  %p660 = scmp.eq.s32.totalorder %s659, 0
  %p661 = pneg %p660
  %663 = shalt.err (%p661)
  %s664 = scalar_lea.sflag [#allocation4], 16
  %665 = vsyncmov %s664
  %s666 = vpop.sfrf %665
  %p667 = scmp.eq.s32.totalorder %s666, 0
  %p668 = pneg %p667
  %670 = shalt.err (%p668)
  %s671 = scalar_lea.sflag [#allocation4], 17
  %672 = vsyncmov %s671
  %s673 = vpop.sfrf %672
  %p674 = scmp.eq.s32.totalorder %s673, 0
  %p675 = pneg %p674
  %677 = shalt.err (%p675)
  %s678 = scalar_lea.sflag [#allocation4], 18
  %679 = vsyncmov %s678
  %s680 = vpop.sfrf %679
  %p681 = scmp.eq.s32.totalorder %s680, 0
  %p682 = pneg %p681
  %684 = shalt.err (%p682)
  %s685 = scalar_lea.sflag [#allocation4], 19
  %686 = vsyncmov %s685
  %s687 = vpop.sfrf %686
  %p688 = scmp.eq.s32.totalorder %s687, 0
  %p689 = pneg %p688
  %691 = shalt.err (%p689)
  %s692 = scalar_lea.sflag [#allocation4], 20
  %693 = vsyncmov %s692
  %s694 = vpop.sfrf %693
  %p695 = scmp.eq.s32.totalorder %s694, 0
  %p696 = pneg %p695
  %698 = shalt.err (%p696)
  %s699 = scalar_lea.sflag [#allocation4], 21
  %700 = vsyncmov %s699
  %s701 = vpop.sfrf %700
  %p702 = scmp.eq.s32.totalorder %s701, 0
  %p703 = pneg %p702
  %705 = shalt.err (%p703)
  %s706 = scalar_lea.sflag [#allocation4], 22
  %707 = vsyncmov %s706
  %s708 = vpop.sfrf %707
  %p709 = scmp.eq.s32.totalorder %s708, 0
  %p710 = pneg %p709
  %712 = shalt.err (%p710)
  %s713 = scalar_lea.sflag [#allocation4], 23
  %714 = vsyncmov %s713
  %s715 = vpop.sfrf %714
  %p716 = scmp.eq.s32.totalorder %s715, 0
  %p717 = pneg %p716
  %719 = shalt.err (%p717)
  %s720 = scalar_lea.sflag [#allocation4], 24
  %721 = vsyncmov %s720
  %s722 = vpop.sfrf %721
  %p723 = scmp.eq.s32.totalorder %s722, 0
  %p724 = pneg %p723
  %726 = shalt.err (%p724)
  %s727 = scalar_lea.sflag [#allocation4], 25
  %728 = vsyncmov %s727
  %s729 = vpop.sfrf %728
  %p730 = scmp.eq.s32.totalorder %s729, 0
  %p731 = pneg %p730
  %733 = shalt.err (%p731)
  %s734 = scalar_lea.sflag [#allocation4], 26
  %735 = vsyncmov %s734
  %s736 = vpop.sfrf %735
  %p737 = scmp.eq.s32.totalorder %s736, 0
  %p738 = pneg %p737
  %740 = shalt.err (%p738)
  %s741 = scalar_lea.sflag [#allocation4], 27
  %742 = vsyncmov %s741
  %s743 = vpop.sfrf %742
  %p744 = scmp.eq.s32.totalorder %s743, 0
  %p745 = pneg %p744
  %747 = shalt.err (%p745)
  %s748 = scalar_lea.sflag [#allocation4], 28
  %749 = vsyncmov %s748
  %s750 = vpop.sfrf %749
  %p751 = scmp.eq.s32.totalorder %s750, 0
  %p752 = pneg %p751
  %754 = shalt.err (%p752)
  %s755 = scalar_lea.sflag [#allocation4], 29
  %756 = vsyncmov %s755
  %s757 = vpop.sfrf %756
  %p758 = scmp.eq.s32.totalorder %s757, 0
  %p759 = pneg %p758
  %761 = shalt.err (%p759)
  %s762 = scalar_lea.sflag [#allocation4], 30
  %763 = vsyncmov %s762
  %s764 = vpop.sfrf %763
  %p765 = scmp.eq.s32.totalorder %s764, 0
  %p766 = pneg %p765
  %768 = shalt.err (%p766)
  %s769 = scalar_lea.sflag [#allocation4], 31
  %770 = vsyncmov %s769
  %s771 = vpop.sfrf %770
  %p772 = scmp.eq.s32.totalorder %s771, 0
  %p773 = pneg %p772
  %775 = shalt.err (%p773)

</llo_original>
